<compile_context>
chip_gen: v7x
topology: tpu7x:2x2x1
jax: 0.10.0
libtpu: 0.0.40
codegen_flags: <defaults>
</compile_context>

<pallas_src>
import jax
import jax.numpy as jnp
import numpy as np
from jax.experimental import pallas as pl
from jax.experimental.pallas import tpu as pltpu

INPUT_DIM = 1
OUTPUT_DIM = 2
HIDDEN_DIM = 64
NUM_BLOCKS = 3

PACK = 2                        # samples packed per 128-lane row
PH = PACK * HIDDEN_DIM          # 128: packed hidden width (full vreg lanes)
POUT = PACK * OUTPUT_DIM        # 4:   packed output width
PCHUNK = 128                    # packed rows per inner chunk (bounds vreg live ranges)


def _resnet_kernel(t_ref, win_ref, bin_ref, w1_ref, b1_ref, w2_ref, b2_ref,
                   wout_ref, bout_ref, o_ref):
    # t_ref:   (TP, 2)  f32   row i = (t[2i], t[2i+1])
    # win:     (2, 128) f32   row 0 = [w_in | 0], row 1 = [0 | w_in]
    # bin:     (1, 128) f32   [b_in | b_in]
    # w1/w2:   (NUM_BLOCKS, 128, 128) f32  block-diagonal [[W, 0], [0, W]]
    # b1/b2:   (NUM_BLOCKS, 1, 128)  f32   [b | b]
    # wout:    (128, 4) f32   [[W_out, 0], [0, W_out]]
    # bout:    (1, 4)   f32   [b_out | b_out]
    # o_ref:   (TP, 4)  f32   row i = (theta[2i], omega[2i], theta[2i+1], omega[2i+1])
    tp = t_ref.shape[0]
    chunk = min(PCHUNK, tp)          # static
    nch = tp // chunk                # static

    def process(r):
        t2 = t_ref[pl.ds(r, chunk), :]                            # (chunk, 2) f32

        # Input layer (K=1 per sample): broadcast-multiply each sample's scalar t
        # against its half of the packed weight row (avoids a degenerate-K matmul).
        x = jnp.tanh(t2[:, 0:1] * win_ref[0:1, :]
                     + t2[:, 1:2] * win_ref[1:2, :]
                     + bin_ref[...])                              # (chunk, 128) f32

        # Residual blocks: small static count -> unrolled; block-diagonal packed
        # weights keep the two samples independent. Everything stays f32.
        for i in range(NUM_BLOCKS):
            h = jnp.tanh(jnp.dot(x, w1_ref[i],
                                 preferred_element_type=jnp.float32) + b1_ref[i])
            x = x + jnp.dot(h, w2_ref[i],
                            preferred_element_type=jnp.float32) + b2_ref[i]

        # Output layer: narrow (chunk, 4) store — 8 B per sample of writeback.
        o_ref[pl.ds(r, chunk), :] = (
            jnp.dot(x, wout_ref[...], preferred_element_type=jnp.float32)
            + bout_ref[...])

    if nch == 1:
        process(0)
    else:
        @pl.loop(0, nch)
        def _(c):
            process(pl.multiple_of(c * chunk, chunk))


def _pick_tile_p(n_samples):
    """Packed-row tile: prefer >= 4 grid steps (2 pipelined steps per TensorCore
    on v7x megacore); high ceiling since per-step HBM traffic is now tiny and the
    inner chunk loop bounds vreg pressure inside the kernel."""
    np_ = pl.cdiv(n_samples, PACK)
    for cand in (2048, 1024, 512, 256, 128):
        if np_ >= 4 * cand:
            return cand
    for cand in (128, 64, 32, 16, 8):
        if np_ >= 2 * cand:
            return cand
    return 8


def _prep_params(params):
    """Build the lane-packed parameter set (two samples per 128-lane row).

    Hidden weights become block-diagonal [[W,0],[0,W]]; biases are tiled across
    the two lane halves. All parameters stay f32 (full parity with the module)."""
    win, bin_, w1, b1, w2, b2, wout, bout = params
    H = HIDDEN_DIM

    def blockdiag(w):                                     # (H, H) -> (2H, 2H)
        z = jnp.zeros((PH, PH), jnp.float32)
        z = z.at[:H, :H].set(w)
        z = z.at[H:, H:].set(w)
        return z

    win2 = jnp.zeros((PACK, PH), jnp.float32)
    win2 = win2.at[0, :H].set(win[0])
    win2 = win2.at[1, H:].set(win[0])
    bin2 = jnp.tile(bin_, (1, PACK))                      # (1, 128)

    w1p = jnp.stack([blockdiag(w1[i]) for i in range(NUM_BLOCKS)])
    w2p = jnp.stack([blockdiag(w2[i]) for i in range(NUM_BLOCKS)])
    b1p = jnp.tile(b1, (1, 1, PACK))                      # (NB, 1, 128)
    b2p = jnp.tile(b2, (1, 1, PACK))

    woutp = jnp.zeros((PH, POUT), jnp.float32)
    woutp = woutp.at[:H, :OUTPUT_DIM].set(wout)
    woutp = woutp.at[H:, OUTPUT_DIM:].set(wout)
    boutp = jnp.tile(bout, (1, PACK))                     # (1, 4)

    return win2, bin2, w1p, b1p, w2p, b2p, woutp, boutp


def resnet_forward(t, params, *, tile_p=None):
    """t: [N, 1] float32. Returns [N, 2] float32 (columns: theta, omega)."""
    n = t.shape[0]
    if tile_p is None:
        tile_p = _pick_tile_p(n)
    assert tile_p % 8 == 0

    # Pad samples so the packed-row count is a tile multiple; padded rows are
    # computed (finite garbage) and sliced off below — negligible with the
    # narrow output.
    np_pad = pl.cdiv(pl.cdiv(n, PACK), tile_p) * tile_p   # packed rows, padded
    n_pad = PACK * np_pad
    if n_pad != n:
        t = jnp.pad(t, ((0, n_pad - n), (0, 0)))
    t2 = t.reshape(np_pad, PACK)                          # row i = (t[2i], t[2i+1])

    win2, bin2, w1p, b1p, w2p, b2p, woutp, boutp = _prep_params(params)
    grid = (np_pad // tile_p,)

    # Constant index_maps -> weights are DMA'd once and stay resident in VMEM.
    const2 = lambda i: (0, 0)       # noqa: E731
    const3 = lambda i: (0, 0, 0)    # noqa: E731

    flops = np_pad * (2 * PACK * PH
                      + NUM_BLOCKS * 2 * (2 * PH * PH)
                      + 2 * PH * POUT)
    transcendentals = np_pad * PH * (1 + NUM_BLOCKS)
    weight_bytes = sum(int(a.size) * a.dtype.itemsize
                       for a in (win2, bin2, w1p, b1p, w2p, b2p, woutp, boutp))
    bytes_accessed = np_pad * PACK * 4 + np_pad * POUT * 4 + weight_bytes

    out = pl.pallas_call(
        _resnet_kernel,
        out_shape=jax.ShapeDtypeStruct((np_pad, POUT), jnp.float32),
        grid_spec=pl.GridSpec(
            grid=grid,
            in_specs=[
                pl.BlockSpec((tile_p, PACK), lambda i: (i, 0)),             # t2
                pl.BlockSpec((PACK, PH), const2),                           # win
                pl.BlockSpec((1, PH), const2),                              # bin
                pl.BlockSpec((NUM_BLOCKS, PH, PH), const3),                 # w1
                pl.BlockSpec((NUM_BLOCKS, 1, PH), const3),                  # b1
                pl.BlockSpec((NUM_BLOCKS, PH, PH), const3),                 # w2
                pl.BlockSpec((NUM_BLOCKS, 1, PH), const3),                  # b2
                pl.BlockSpec((PH, POUT), const2),                           # wout
                pl.BlockSpec((1, POUT), const2),                            # bout
            ],
            out_specs=pl.BlockSpec((tile_p, POUT), lambda i: (i, 0)),
        ),
        compiler_params=pltpu.CompilerParams(
            dimension_semantics=("parallel",),
        ),
        cost_estimate=pl.CostEstimate(
            flops=int(flops),
            transcendentals=int(transcendentals),
            bytes_accessed=int(bytes_accessed),
        ),
    )(t2, win2, bin2, w1p, b1p, w2p, b2p, woutp, boutp)

    # (np_pad, 4) -> (n_pad, 2): row i cols [0:2] are sample 2i, cols [2:4] are 2i+1.
    return out.reshape(n_pad, OUTPUT_DIM)[:n]


def init_params(key):
    """Deterministic synthetic parameters matching the module's shapes.

    Weights are stored as [in_features, out_features] so the kernel computes
    x @ W + b (equivalent to PyTorch's x @ W.T + b with W = [out, in])."""
    ks = jax.random.split(key, 8)

    def lin(k, fan_in, fan_out):
        bound = 1.0 / np.sqrt(fan_in)
        kw, kb = jax.random.split(k)
        w = jax.random.uniform(kw, (fan_in, fan_out), jnp.float32, -bound, bound)
        b = jax.random.uniform(kb, (1, fan_out), jnp.float32, -bound, bound)
        return w, b

    win, bin_ = lin(ks[0], INPUT_DIM, HIDDEN_DIM)
    w1s, b1s, w2s, b2s = [], [], [], []
    for i in range(NUM_BLOCKS):
        w1, b1 = lin(ks[1 + 2 * i], HIDDEN_DIM, HIDDEN_DIM)
        w2, b2 = lin(ks[2 + 2 * i], HIDDEN_DIM, HIDDEN_DIM)
        w1s.append(w1); b1s.append(b1); w2s.append(w2); b2s.append(b2)
    wout, bout = lin(ks[7], HIDDEN_DIM, OUTPUT_DIM)

    return (win, bin_,
            jnp.stack(w1s), jnp.stack(b1s),
            jnp.stack(w2s), jnp.stack(b2s),
            wout, bout)


def resnet_reference(t, params):
    """Pure-JAX f32 reference of the original module (HIGHEST-precision dots)."""
    win, bin_, w1, b1, w2, b2, wout, bout = params
    hp = jax.lax.Precision.HIGHEST
    x = jnp.tanh(t * win + bin_)                   # K=1 input layer as broadcast
    for i in range(NUM_BLOCKS):
        h = jnp.tanh(jnp.dot(x, w1[i], precision=hp,
                             preferred_element_type=jnp.float32) + b1[i])
        x = x + jnp.dot(h, w2[i], precision=hp,
                        preferred_element_type=jnp.float32) + b2[i]
    return jnp.dot(x, wout, precision=hp,
                   preferred_element_type=jnp.float32) + bout


if __name__ == "__main__":
    key = jax.random.PRNGKey(0)
    k_t, k_p = jax.random.split(key)

    params = init_params(k_p)

    # 't' coordinate column, shape [N, 1] (what x_in.extract(['t']) provides).
    N = 512
    t = jax.random.uniform(k_t, (N, INPUT_DIM), jnp.float32, 0.0, 10.0)

    out = jax.block_until_ready(resnet_forward(t, params))   # tile_p=128, grid=2
    assert out.shape == (N, OUTPUT_DIM)
    ref = jax.block_until_ready(resnet_reference(t, params))
    np.testing.assert_allclose(np.asarray(out), np.asarray(ref),
                               rtol=2e-2, atol=2e-2)

    # Odd / ragged batch: exercises the pad-to-tile and half-filled-row path.
    t2 = jax.random.uniform(jax.random.PRNGKey(1), (101, INPUT_DIM),
                            jnp.float32, 0.0, 10.0)
    out2 = jax.block_until_ready(resnet_forward(t2, params))
    assert out2.shape == (101, OUTPUT_DIM)
    np.testing.assert_allclose(np.asarray(out2),
                               np.asarray(resnet_reference(t2, params)),
                               rtol=2e-2, atol=2e-2)

    # Larger batch: exercises the inner pl.loop chunking path (tile_p=256, nch=2).
    t3 = jax.random.uniform(jax.random.PRNGKey(2), (2048, INPUT_DIM),
                            jnp.float32, 0.0, 10.0)
    out3 = jax.block_until_ready(resnet_forward(t3, params))
    assert out3.shape == (2048, OUTPUT_DIM)
    np.testing.assert_allclose(np.asarray(out3),
                               np.asarray(resnet_reference(t3, params)),
                               rtol=2e-2, atol=2e-2)

    print("KERNEL_OK")
</pallas_src>

<mosaic_0001>
module attributes {stable_mosaic.version = 11 : i64} {
  func.func @_resnet_kernel(%arg0: i32, %arg1: memref<128x2xf32, #tpu.memory_space<vmem>>, %arg2: memref<2x128xf32, #tpu.memory_space<vmem>>, %arg3: memref<1x128xf32, #tpu.memory_space<vmem>>, %arg4: memref<3x128x128xf32, #tpu.memory_space<vmem>>, %arg5: memref<3x1x128xf32, #tpu.memory_space<vmem>>, %arg6: memref<3x128x128xf32, #tpu.memory_space<vmem>>, %arg7: memref<3x1x128xf32, #tpu.memory_space<vmem>>, %arg8: memref<128x4xf32, #tpu.memory_space<vmem>>, %arg9: memref<1x4xf32, #tpu.memory_space<vmem>>, %arg10: memref<128x4xf32, #tpu.memory_space<vmem>>) attributes {dimension_semantics = [#tpu.dimension_semantics<parallel>], iteration_bounds = array<i64: 2>, scalar_prefetch = 0 : i64, scratch_operands = 0 : i64, tpu.core_type = #tpu.core_type<tc>, window_params = [{transform_indices = @transform_0, window_bounds = array<i64: 128, 2>}, {pipeline_mode = #tpu.pipeline_mode<synchronous>, transform_indices = @transform_1, window_bounds = array<i64: 2, 128>}, {pipeline_mode = #tpu.pipeline_mode<synchronous>, transform_indices = @transform_2, window_bounds = array<i64: 1, 128>}, {pipeline_mode = #tpu.pipeline_mode<synchronous>, transform_indices = @transform_3, window_bounds = array<i64: 3, 128, 128>}, {pipeline_mode = #tpu.pipeline_mode<synchronous>, transform_indices = @transform_4, window_bounds = array<i64: 3, 1, 128>}, {pipeline_mode = #tpu.pipeline_mode<synchronous>, transform_indices = @transform_5, window_bounds = array<i64: 3, 128, 128>}, {pipeline_mode = #tpu.pipeline_mode<synchronous>, transform_indices = @transform_6, window_bounds = array<i64: 3, 1, 128>}, {pipeline_mode = #tpu.pipeline_mode<synchronous>, transform_indices = @transform_7, window_bounds = array<i64: 128, 4>}, {pipeline_mode = #tpu.pipeline_mode<synchronous>, transform_indices = @transform_8, window_bounds = array<i64: 1, 4>}, {transform_indices = @transform_9, window_bounds = array<i64: 128, 4>}]} {
    %c0 = arith.constant 0 : index
    %c0_0 = arith.constant 0 : index
    %0 = vector.load %arg1[%c0, %c0_0] : memref<128x2xf32, #tpu.memory_space<vmem>>, vector<128x2xf32>
    %1 = vector.extract_strided_slice %0 {offsets = [0, 0], sizes = [128, 1], strides = [1, 1]} : vector<128x2xf32> to vector<128x1xf32>
    %c0_1 = arith.constant 0 : index
    %c0_2 = arith.constant 0 : index
    %2 = vector.load %arg2[%c0_1, %c0_2] : memref<2x128xf32, #tpu.memory_space<vmem>>, vector<1x128xf32>
    %3 = vector.broadcast %1 : vector<128x1xf32> to vector<128x128xf32>
    %4 = vector.broadcast %2 : vector<1x128xf32> to vector<128x128xf32>
    %5 = arith.mulf %3, %4 : vector<128x128xf32>
    %6 = vector.extract_strided_slice %0 {offsets = [0, 1], sizes = [128, 1], strides = [1, 1]} : vector<128x2xf32> to vector<128x1xf32>
    %c1 = arith.constant 1 : index
    %c0_3 = arith.constant 0 : index
    %7 = vector.load %arg2[%c1, %c0_3] : memref<2x128xf32, #tpu.memory_space<vmem>>, vector<1x128xf32>
    %8 = vector.broadcast %6 : vector<128x1xf32> to vector<128x128xf32>
    %9 = vector.broadcast %7 : vector<1x128xf32> to vector<128x128xf32>
    %10 = arith.mulf %8, %9 : vector<128x128xf32>
    %11 = arith.addf %5, %10 : vector<128x128xf32>
    %c0_4 = arith.constant 0 : index
    %c0_5 = arith.constant 0 : index
    %12 = vector.load %arg3[%c0_4, %c0_5] : memref<1x128xf32, #tpu.memory_space<vmem>>, vector<1x128xf32>
    %13 = vector.broadcast %12 : vector<1x128xf32> to vector<128x128xf32>
    %14 = arith.addf %11, %13 : vector<128x128xf32>
    %15 = math.tanh %14 : vector<128x128xf32>
    %c0_6 = arith.constant 0 : index
    %c0_7 = arith.constant 0 : index
    %c0_8 = arith.constant 0 : index
    %16 = vector.load %arg4[%c0_6, %c0_7, %c0_8] : memref<3x128x128xf32, #tpu.memory_space<vmem>>, vector<1x128x128xf32>
    %17 = vector.shape_cast %16 : vector<1x128x128xf32> to vector<128x128xf32>
    %cst = arith.constant dense<0.000000e+00> : vector<128x128xf32>
    %18 = tpu.matmul %15, %17, %cst {dimension_numbers = #tpu.dot_dimension_numbers<[1], [0], [0], [1], [0, 0, 1, 1], [], []>} : vector<128x128xf32>, vector<128x128xf32>, vector<128x128xf32> -> vector<128x128xf32>
    %c0_9 = arith.constant 0 : index
    %c0_10 = arith.constant 0 : index
    %c0_11 = arith.constant 0 : index
    %19 = vector.load %arg5[%c0_9, %c0_10, %c0_11] : memref<3x1x128xf32, #tpu.memory_space<vmem>>, vector<1x1x128xf32>
    %20 = vector.shape_cast %19 : vector<1x1x128xf32> to vector<1x128xf32>
    %21 = vector.broadcast %20 : vector<1x128xf32> to vector<128x128xf32>
    %22 = arith.addf %18, %21 : vector<128x128xf32>
    %23 = math.tanh %22 : vector<128x128xf32>
    %c0_12 = arith.constant 0 : index
    %c0_13 = arith.constant 0 : index
    %c0_14 = arith.constant 0 : index
    %24 = vector.load %arg6[%c0_12, %c0_13, %c0_14] : memref<3x128x128xf32, #tpu.memory_space<vmem>>, vector<1x128x128xf32>
    %25 = vector.shape_cast %24 : vector<1x128x128xf32> to vector<128x128xf32>
    %cst_15 = arith.constant dense<0.000000e+00> : vector<128x128xf32>
    %26 = tpu.matmul %23, %25, %cst_15 {dimension_numbers = #tpu.dot_dimension_numbers<[1], [0], [0], [1], [0, 0, 1, 1], [], []>} : vector<128x128xf32>, vector<128x128xf32>, vector<128x128xf32> -> vector<128x128xf32>
    %27 = arith.addf %15, %26 : vector<128x128xf32>
    %c0_16 = arith.constant 0 : index
    %c0_17 = arith.constant 0 : index
    %c0_18 = arith.constant 0 : index
    %28 = vector.load %arg7[%c0_16, %c0_17, %c0_18] : memref<3x1x128xf32, #tpu.memory_space<vmem>>, vector<1x1x128xf32>
    %29 = vector.shape_cast %28 : vector<1x1x128xf32> to vector<1x128xf32>
    %30 = vector.broadcast %29 : vector<1x128xf32> to vector<128x128xf32>
    %31 = arith.addf %27, %30 : vector<128x128xf32>
    %c1_19 = arith.constant 1 : index
    %c0_20 = arith.constant 0 : index
    %c0_21 = arith.constant 0 : index
    %32 = vector.load %arg4[%c1_19, %c0_20, %c0_21] : memref<3x128x128xf32, #tpu.memory_space<vmem>>, vector<1x128x128xf32>
    %33 = vector.shape_cast %32 : vector<1x128x128xf32> to vector<128x128xf32>
    %cst_22 = arith.constant dense<0.000000e+00> : vector<128x128xf32>
    %34 = tpu.matmul %31, %33, %cst_22 {dimension_numbers = #tpu.dot_dimension_numbers<[1], [0], [0], [1], [0, 0, 1, 1], [], []>} : vector<128x128xf32>, vector<128x128xf32>, vector<128x128xf32> -> vector<128x128xf32>
    %c1_23 = arith.constant 1 : index
    %c0_24 = arith.constant 0 : index
    %c0_25 = arith.constant 0 : index
    %35 = vector.load %arg5[%c1_23, %c0_24, %c0_25] : memref<3x1x128xf32, #tpu.memory_space<vmem>>, vector<1x1x128xf32>
    %36 = vector.shape_cast %35 : vector<1x1x128xf32> to vector<1x128xf32>
    %37 = vector.broadcast %36 : vector<1x128xf32> to vector<128x128xf32>
    %38 = arith.addf %34, %37 : vector<128x128xf32>
    %39 = math.tanh %38 : vector<128x128xf32>
    %c1_26 = arith.constant 1 : index
    %c0_27 = arith.constant 0 : index
    %c0_28 = arith.constant 0 : index
    %40 = vector.load %arg6[%c1_26, %c0_27, %c0_28] : memref<3x128x128xf32, #tpu.memory_space<vmem>>, vector<1x128x128xf32>
    %41 = vector.shape_cast %40 : vector<1x128x128xf32> to vector<128x128xf32>
    %cst_29 = arith.constant dense<0.000000e+00> : vector<128x128xf32>
    %42 = tpu.matmul %39, %41, %cst_29 {dimension_numbers = #tpu.dot_dimension_numbers<[1], [0], [0], [1], [0, 0, 1, 1], [], []>} : vector<128x128xf32>, vector<128x128xf32>, vector<128x128xf32> -> vector<128x128xf32>
    %43 = arith.addf %31, %42 : vector<128x128xf32>
    %c1_30 = arith.constant 1 : index
    %c0_31 = arith.constant 0 : index
    %c0_32 = arith.constant 0 : index
    %44 = vector.load %arg7[%c1_30, %c0_31, %c0_32] : memref<3x1x128xf32, #tpu.memory_space<vmem>>, vector<1x1x128xf32>
    %45 = vector.shape_cast %44 : vector<1x1x128xf32> to vector<1x128xf32>
    %46 = vector.broadcast %45 : vector<1x128xf32> to vector<128x128xf32>
    %47 = arith.addf %43, %46 : vector<128x128xf32>
    %c2 = arith.constant 2 : index
    %c0_33 = arith.constant 0 : index
    %c0_34 = arith.constant 0 : index
    %48 = vector.load %arg4[%c2, %c0_33, %c0_34] : memref<3x128x128xf32, #tpu.memory_space<vmem>>, vector<1x128x128xf32>
    %49 = vector.shape_cast %48 : vector<1x128x128xf32> to vector<128x128xf32>
    %cst_35 = arith.constant dense<0.000000e+00> : vector<128x128xf32>
    %50 = tpu.matmul %47, %49, %cst_35 {dimension_numbers = #tpu.dot_dimension_numbers<[1], [0], [0], [1], [0, 0, 1, 1], [], []>} : vector<128x128xf32>, vector<128x128xf32>, vector<128x128xf32> -> vector<128x128xf32>
    %c2_36 = arith.constant 2 : index
    %c0_37 = arith.constant 0 : index
    %c0_38 = arith.constant 0 : index
    %51 = vector.load %arg5[%c2_36, %c0_37, %c0_38] : memref<3x1x128xf32, #tpu.memory_space<vmem>>, vector<1x1x128xf32>
    %52 = vector.shape_cast %51 : vector<1x1x128xf32> to vector<1x128xf32>
    %53 = vector.broadcast %52 : vector<1x128xf32> to vector<128x128xf32>
    %54 = arith.addf %50, %53 : vector<128x128xf32>
    %55 = math.tanh %54 : vector<128x128xf32>
    %c2_39 = arith.constant 2 : index
    %c0_40 = arith.constant 0 : index
    %c0_41 = arith.constant 0 : index
    %56 = vector.load %arg6[%c2_39, %c0_40, %c0_41] : memref<3x128x128xf32, #tpu.memory_space<vmem>>, vector<1x128x128xf32>
    %57 = vector.shape_cast %56 : vector<1x128x128xf32> to vector<128x128xf32>
    %cst_42 = arith.constant dense<0.000000e+00> : vector<128x128xf32>
    %58 = tpu.matmul %55, %57, %cst_42 {dimension_numbers = #tpu.dot_dimension_numbers<[1], [0], [0], [1], [0, 0, 1, 1], [], []>} : vector<128x128xf32>, vector<128x128xf32>, vector<128x128xf32> -> vector<128x128xf32>
    %59 = arith.addf %47, %58 : vector<128x128xf32>
    %c2_43 = arith.constant 2 : index
    %c0_44 = arith.constant 0 : index
    %c0_45 = arith.constant 0 : index
    %60 = vector.load %arg7[%c2_43, %c0_44, %c0_45] : memref<3x1x128xf32, #tpu.memory_space<vmem>>, vector<1x1x128xf32>
    %61 = vector.shape_cast %60 : vector<1x1x128xf32> to vector<1x128xf32>
    %62 = vector.broadcast %61 : vector<1x128xf32> to vector<128x128xf32>
    %63 = arith.addf %59, %62 : vector<128x128xf32>
    %c0_46 = arith.constant 0 : index
    %c0_47 = arith.constant 0 : index
    %64 = vector.load %arg8[%c0_46, %c0_47] : memref<128x4xf32, #tpu.memory_space<vmem>>, vector<128x4xf32>
    %cst_48 = arith.constant dense<0.000000e+00> : vector<128x4xf32>
    %65 = tpu.matmul %63, %64, %cst_48 {dimension_numbers = #tpu.dot_dimension_numbers<[1], [0], [0], [1], [0, 0, 1, 1], [], []>} : vector<128x128xf32>, vector<128x4xf32>, vector<128x4xf32> -> vector<128x4xf32>
    %c0_49 = arith.constant 0 : index
    %c0_50 = arith.constant 0 : index
    %66 = vector.load %arg9[%c0_49, %c0_50] : memref<1x4xf32, #tpu.memory_space<vmem>>, vector<1x4xf32>
    %67 = vector.broadcast %66 : vector<1x4xf32> to vector<128x4xf32>
    %68 = arith.addf %65, %67 : vector<128x4xf32>
    %c0_51 = arith.constant 0 : index
    %c0_52 = arith.constant 0 : index
    %69 = vector.load %arg10[%c0_51, %c0_52] : memref<128x4xf32, #tpu.memory_space<vmem>>, vector<128x4xf32>
    tpu.vector_store %arg10[%c0_51, %c0_52], %68 {strides = array<i32>} : memref<128x4xf32, #tpu.memory_space<vmem>>, vector<128x4xf32>,
    return
  }
  func.func @transform_0(%arg0: i32) -> (i32, i32) {
    %c0_i32 = arith.constant 0 : i32
    %c0_i32_0 = arith.constant 0 : i32
    return %arg0, %c0_i32 : i32, i32
  }
  func.func @transform_1(%arg0: i32) -> (i32, i32) {
    %c0_i32 = arith.constant 0 : i32
    %c0_i32_0 = arith.constant 0 : i32
    %c0_i32_1 = arith.constant 0 : i32
    return %c0_i32, %c0_i32_0 : i32, i32
  }
  func.func @transform_2(%arg0: i32) -> (i32, i32) {
    %c0_i32 = arith.constant 0 : i32
    %c0_i32_0 = arith.constant 0 : i32
    %c0_i32_1 = arith.constant 0 : i32
    return %c0_i32, %c0_i32_0 : i32, i32
  }
  func.func @transform_3(%arg0: i32) -> (i32, i32, i32) {
    %c0_i32 = arith.constant 0 : i32
    %c0_i32_0 = arith.constant 0 : i32
    %c0_i32_1 = arith.constant 0 : i32
    %c0_i32_2 = arith.constant 0 : i32
    return %c0_i32, %c0_i32_0, %c0_i32_1 : i32, i32, i32
  }
  func.func @transform_4(%arg0: i32) -> (i32, i32, i32) {
    %c0_i32 = arith.constant 0 : i32
    %c0_i32_0 = arith.constant 0 : i32
    %c0_i32_1 = arith.constant 0 : i32
    %c0_i32_2 = arith.constant 0 : i32
    return %c0_i32, %c0_i32_0, %c0_i32_1 : i32, i32, i32
  }
  func.func @transform_5(%arg0: i32) -> (i32, i32, i32) {
    %c0_i32 = arith.constant 0 : i32
    %c0_i32_0 = arith.constant 0 : i32
    %c0_i32_1 = arith.constant 0 : i32
    %c0_i32_2 = arith.constant 0 : i32
    return %c0_i32, %c0_i32_0, %c0_i32_1 : i32, i32, i32
  }
  func.func @transform_6(%arg0: i32) -> (i32, i32, i32) {
    %c0_i32 = arith.constant 0 : i32
    %c0_i32_0 = arith.constant 0 : i32
    %c0_i32_1 = arith.constant 0 : i32
    %c0_i32_2 = arith.constant 0 : i32
    return %c0_i32, %c0_i32_0, %c0_i32_1 : i32, i32, i32
  }
  func.func @transform_7(%arg0: i32) -> (i32, i32) {
    %c0_i32 = arith.constant 0 : i32
    %c0_i32_0 = arith.constant 0 : i32
    %c0_i32_1 = arith.constant 0 : i32
    return %c0_i32, %c0_i32_0 : i32, i32
  }
  func.func @transform_8(%arg0: i32) -> (i32, i32) {
    %c0_i32 = arith.constant 0 : i32
    %c0_i32_0 = arith.constant 0 : i32
    %c0_i32_1 = arith.constant 0 : i32
    return %c0_i32, %c0_i32_0 : i32, i32
  }
  func.func @transform_9(%arg0: i32) -> (i32, i32) {
    %c0_i32 = arith.constant 0 : i32
    %c0_i32_0 = arith.constant 0 : i32
    return %arg0, %c0_i32 : i32, i32
  }
}

</mosaic_0001>

<llo_original>
// kernel: tpu_custom_call.1
$region0: #{tpu_custom_call.1}
  #allocation0 [shape = 'u32[]', space=smem, size = 0x4, offset = 0x4, fixed_abs, tag = 'smem constant byte address 0x4 - core index']
  #allocation1 [shape = 'u32[144,128]{1,0:T(1,128)}', space=vmem, size = 0x12000, scoped, tag = 'internal scratch']
  %s0 = inlined_call_operand.vmem [shape: f32[256,2], index: 0, kind: input, shape index: {}]
  %s1 = inlined_call_operand.vmem [shape: f32[2,128], index: 1, kind: input, shape index: {}]
  %s2 = inlined_call_operand.vmem [shape: f32[1,128], index: 2, kind: input, shape index: {}]
  %s3 = inlined_call_operand.vmem [shape: f32[3,128,128], index: 3, kind: input, shape index: {}]
  %s4 = inlined_call_operand.vmem [shape: f32[3,1,128], index: 4, kind: input, shape index: {}]
  %s5 = inlined_call_operand.hbm [shape: f32[3,128,128], index: 5, kind: input, shape index: {}]
  %s6 = inlined_call_operand.vmem [shape: f32[3,1,128], index: 6, kind: input, shape index: {}]
  %s7 = inlined_call_operand.vmem [shape: f32[128,4], index: 7, kind: input, shape index: {}]
  %s8 = inlined_call_operand.vmem [shape: f32[1,4], index: 8, kind: input, shape index: {}]
  %s9 = inlined_call_operand.vmem [shape: f32[256,4], index: 9, kind: output, shape index: {}]
  %s10 = sld [smem:[#allocation0]]
  $region73: #{tpu_custom_call.1} parent=0
    _
  %s12 = ssub.s32 1, %s10
  %s13 = scalar_select 0, %s12, %s10
  $region1: #{tpu_custom_call.1} parent=0
    #allocation2 [shape = 'u8[196608]{0}', space=vmem, size = 0x30000, scoped, tag = 'input window, operand 5, single buffered']
    #allocation3 [shape = 's32[2]{0}', space=sflag, size = 0x8, scoped, tag = 'scoped memory for tpu_custom_call.1']
    %14 = vsyncpa [#allocation3], 0
    loop: start=0, step=1, limit=4
    $region2: #{tpu_custom_call.1} parent=1 // loop_pre_header
      _
    $region3: #{tpu_custom_call.1} parent=1 // loop_header
      %s16 = sphi 0, %s20
      %p17 = scmp.ge.s32.totalorder %s16, 4
      %s26 = sphi 0, %s28
      %s29 = sphi 0, %s26
      %s30 = sphi 0, %s29
      %s46 = sphi 0, %s30
      %s50 = sphi 0, %s50
      %s52 = sphi 0, %s50
      %s53 = sphi 0, %s52
      %s67 = sphi 0, %s53
      %s71 = sphi 0, %s71
      %s73 = sphi 0, %s71
      %s74 = sphi 0, %s73
      %s88 = sphi 0, %s74
      %s92 = sphi 0, %s92
      %s94 = sphi 0, %s92
      %s95 = sphi 0, %s94
      %s109 = sphi 0, %s95
      %s113 = sphi 0, %s113
      %s115 = sphi 0, %s113
      %s116 = sphi 0, %s115
      %s130 = sphi 0, %s116
      %s134 = sphi 0, %s134
      %s136 = sphi 0, %s134
      %s137 = sphi 0, %s136
      %s151 = sphi 0, %s137
      %s155 = sphi 0, %s155
      %s157 = sphi 0, %s155
      %s158 = sphi 0, %s157
      %s172 = sphi 0, %s158
      %s176 = sphi 0, %s176
      %s178 = sphi 0, %s176
      %s179 = sphi 0, %s178
      %s193 = sphi 0, %s179
      %s197 = sphi 0, %s197
      %s199 = sphi 0, %s197
      %s200 = sphi 0, %s199
      %s214 = sphi 0, %s200
      %s220 = sphi 0, %s222
      %s223 = sphi 0, %s220
      %s224 = sphi 0, %s223
      %s240 = sphi 0, %s224
    $region4: #{tpu_custom_call.1} parent=1 // loop_header_branch
      %19 = sbr.rel (%p17) target = $region8
    $region5: #{tpu_custom_call.1} parent=1 // loop_body
      %s21 = ssub.s32 %s16, 1
      %s22 = ssub.s32 %s16, 2
      %s23 = sadd.s32 %s16, 1
      %s24 = ssub.s32 %s16, %s23
      %p25 = scmp.eq.s32.totalorder %s24, 0
      %s27 = sadd.s32 %s26, 1
      %s28 = scalar_select %p25, %s26, %s27
      %p31 = pneg %p25
      %p32 = scmp.eq.s32.totalorder %s16, 1
      %p33 = por %p31, %p32
      %p34 = scmp.ne.s32.totalorder %s26, %s29
      %p35 = scmp.eq.s32.totalorder %s16, 0
      %p36 = por %p34, %p35
      %p37 = scmp.ne.s32.totalorder %s26, %s29
      %p38 = scmp.eq.s32.totalorder %s21, 1
      %p39 = por %p37, %p38
      %p40 = scmp.ne.s32.totalorder %s29, %s30
      %p41 = scmp.eq.s32.totalorder %s21, 0
      %p42 = por %p40, %p41
      %p43 = scmp.ne.s32.totalorder %s29, %s30
      %p44 = scmp.eq.s32.totalorder %s22, 1
      %p45 = por %p43, %p44
      %p47 = scmp.ne.s32.totalorder %s30, %s46
      %p48 = scmp.eq.s32.totalorder %s22, 0
      %p49 = por %p47, %p48
      %s51 = sadd.s32 %s50, 1
      %p54 = scmp.eq.s32.totalorder %s16, 1
      %p55 = scmp.ne.s32.totalorder %s50, %s52
      %p56 = scmp.eq.s32.totalorder %s16, 0
      %p57 = por %p55, %p56
      %p58 = scmp.ne.s32.totalorder %s50, %s52
      %p59 = scmp.eq.s32.totalorder %s21, 1
      %p60 = por %p58, %p59
      %p61 = scmp.ne.s32.totalorder %s52, %s53
      %p62 = scmp.eq.s32.totalorder %s21, 0
      %p63 = por %p61, %p62
      %p64 = scmp.ne.s32.totalorder %s52, %s53
      %p65 = scmp.eq.s32.totalorder %s22, 1
      %p66 = por %p64, %p65
      %p68 = scmp.ne.s32.totalorder %s53, %s67
      %p69 = scmp.eq.s32.totalorder %s22, 0
      %p70 = por %p68, %p69
      %s72 = sadd.s32 %s71, 1
      %p75 = scmp.eq.s32.totalorder %s16, 1
      %p76 = scmp.ne.s32.totalorder %s71, %s73
      %p77 = scmp.eq.s32.totalorder %s16, 0
      %p78 = por %p76, %p77
      %p79 = scmp.ne.s32.totalorder %s71, %s73
      %p80 = scmp.eq.s32.totalorder %s21, 1
      %p81 = por %p79, %p80
      %p82 = scmp.ne.s32.totalorder %s73, %s74
      %p83 = scmp.eq.s32.totalorder %s21, 0
      %p84 = por %p82, %p83
      %p85 = scmp.ne.s32.totalorder %s73, %s74
      %p86 = scmp.eq.s32.totalorder %s22, 1
      %p87 = por %p85, %p86
      %p89 = scmp.ne.s32.totalorder %s74, %s88
      %p90 = scmp.eq.s32.totalorder %s22, 0
      %p91 = por %p89, %p90
      %s93 = sadd.s32 %s92, 1
      %p96 = scmp.eq.s32.totalorder %s16, 1
      %p97 = scmp.ne.s32.totalorder %s92, %s94
      %p98 = scmp.eq.s32.totalorder %s16, 0
      %p99 = por %p97, %p98
      %p100 = scmp.ne.s32.totalorder %s92, %s94
      %p101 = scmp.eq.s32.totalorder %s21, 1
      %p102 = por %p100, %p101
      %p103 = scmp.ne.s32.totalorder %s94, %s95
      %p104 = scmp.eq.s32.totalorder %s21, 0
      %p105 = por %p103, %p104
      %p106 = scmp.ne.s32.totalorder %s94, %s95
      %p107 = scmp.eq.s32.totalorder %s22, 1
      %p108 = por %p106, %p107
      %p110 = scmp.ne.s32.totalorder %s95, %s109
      %p111 = scmp.eq.s32.totalorder %s22, 0
      %p112 = por %p110, %p111
      %s114 = sadd.s32 %s113, 1
      %p117 = scmp.eq.s32.totalorder %s16, 1
      %p118 = scmp.ne.s32.totalorder %s113, %s115
      %p119 = scmp.eq.s32.totalorder %s16, 0
      %p120 = por %p118, %p119
      %p121 = scmp.ne.s32.totalorder %s113, %s115
      %p122 = scmp.eq.s32.totalorder %s21, 1
      %p123 = por %p121, %p122
      %p124 = scmp.ne.s32.totalorder %s115, %s116
      %p125 = scmp.eq.s32.totalorder %s21, 0
      %p126 = por %p124, %p125
      %p127 = scmp.ne.s32.totalorder %s115, %s116
      %p128 = scmp.eq.s32.totalorder %s22, 1
      %p129 = por %p127, %p128
      %p131 = scmp.ne.s32.totalorder %s116, %s130
      %p132 = scmp.eq.s32.totalorder %s22, 0
      %p133 = por %p131, %p132
      %s135 = sadd.s32 %s134, 1
      %p138 = scmp.eq.s32.totalorder %s16, 1
      %p139 = scmp.ne.s32.totalorder %s134, %s136
      %p140 = scmp.eq.s32.totalorder %s16, 0
      %p141 = por %p139, %p140
      %p142 = scmp.ne.s32.totalorder %s134, %s136
      %p143 = scmp.eq.s32.totalorder %s21, 1
      %p144 = por %p142, %p143
      %p145 = scmp.ne.s32.totalorder %s136, %s137
      %p146 = scmp.eq.s32.totalorder %s21, 0
      %p147 = por %p145, %p146
      %p148 = scmp.ne.s32.totalorder %s136, %s137
      %p149 = scmp.eq.s32.totalorder %s22, 1
      %p150 = por %p148, %p149
      %p152 = scmp.ne.s32.totalorder %s137, %s151
      %p153 = scmp.eq.s32.totalorder %s22, 0
      %p154 = por %p152, %p153
      %s156 = sadd.s32 %s155, 1
      %p159 = scmp.eq.s32.totalorder %s16, 1
      %p160 = scmp.ne.s32.totalorder %s155, %s157
      %p161 = scmp.eq.s32.totalorder %s16, 0
      %p162 = por %p160, %p161
      %p163 = scmp.ne.s32.totalorder %s155, %s157
      %p164 = scmp.eq.s32.totalorder %s21, 1
      %p165 = por %p163, %p164
      %p166 = scmp.ne.s32.totalorder %s157, %s158
      %p167 = scmp.eq.s32.totalorder %s21, 0
      %p168 = por %p166, %p167
      %p169 = scmp.ne.s32.totalorder %s157, %s158
      %p170 = scmp.eq.s32.totalorder %s22, 1
      %p171 = por %p169, %p170
      %p173 = scmp.ne.s32.totalorder %s158, %s172
      %p174 = scmp.eq.s32.totalorder %s22, 0
      %p175 = por %p173, %p174
      %s177 = sadd.s32 %s176, 1
      %p180 = scmp.eq.s32.totalorder %s16, 1
      %p181 = scmp.ne.s32.totalorder %s176, %s178
      %p182 = scmp.eq.s32.totalorder %s16, 0
      %p183 = por %p181, %p182
      %p184 = scmp.ne.s32.totalorder %s176, %s178
      %p185 = scmp.eq.s32.totalorder %s21, 1
      %p186 = por %p184, %p185
      %p187 = scmp.ne.s32.totalorder %s178, %s179
      %p188 = scmp.eq.s32.totalorder %s21, 0
      %p189 = por %p187, %p188
      %p190 = scmp.ne.s32.totalorder %s178, %s179
      %p191 = scmp.eq.s32.totalorder %s22, 1
      %p192 = por %p190, %p191
      %p194 = scmp.ne.s32.totalorder %s179, %s193
      %p195 = scmp.eq.s32.totalorder %s22, 0
      %p196 = por %p194, %p195
      %s198 = sadd.s32 %s197, 1
      %p201 = scmp.eq.s32.totalorder %s16, 1
      %p202 = scmp.ne.s32.totalorder %s197, %s199
      %p203 = scmp.eq.s32.totalorder %s16, 0
      %p204 = por %p202, %p203
      %p205 = scmp.ne.s32.totalorder %s197, %s199
      %p206 = scmp.eq.s32.totalorder %s21, 1
      %p207 = por %p205, %p206
      %p208 = scmp.ne.s32.totalorder %s199, %s200
      %p209 = scmp.eq.s32.totalorder %s21, 0
      %p210 = por %p208, %p209
      %p211 = scmp.ne.s32.totalorder %s199, %s200
      %p212 = scmp.eq.s32.totalorder %s22, 1
      %p213 = por %p211, %p212
      %p215 = scmp.ne.s32.totalorder %s200, %s214
      %p216 = scmp.eq.s32.totalorder %s22, 0
      %p217 = por %p215, %p216
      %s218 = ssub.s32 %s16, %s23
      %p219 = scmp.eq.s32.totalorder %s218, 0
      %s221 = sadd.s32 %s220, 1
      %s222 = scalar_select %p219, %s220, %s221
      %p225 = pneg %p219
      %p226 = scmp.eq.s32.totalorder %s16, 1
      %p227 = por %p225, %p226
      %p228 = scmp.ne.s32.totalorder %s220, %s223
      %p229 = scmp.eq.s32.totalorder %s16, 0
      %p230 = por %p228, %p229
      %p231 = scmp.ne.s32.totalorder %s220, %s223
      %p232 = scmp.eq.s32.totalorder %s21, 1
      %p233 = por %p231, %p232
      %p234 = scmp.ne.s32.totalorder %s223, %s224
      %p235 = scmp.eq.s32.totalorder %s21, 0
      %p236 = por %p234, %p235
      %p237 = scmp.ne.s32.totalorder %s223, %s224
      %p238 = scmp.eq.s32.totalorder %s22, 1
      %p239 = por %p237, %p238
      %p241 = scmp.ne.s32.totalorder %s224, %s240
      %p242 = scmp.eq.s32.totalorder %s22, 0
      %p243 = por %p241, %p242
      %p244 = scmp.le.s32.totalorder 1, %s16
      %p245 = scmp.lt.s32.totalorder %s16, 3
      %p246 = pnand %p244, %p245
      %p247 = pneg %p246
      // Predicated region
      $region9: #{tpu_custom_call.1} parent=5 // pred_check
        _
      $region10: #{tpu_custom_call.1} parent=5 // pred_check_branch
        %249 = sbr.rel (%p246) target = $region12
      $region11: #{tpu_custom_call.1} parent=5 // pred_region
        %s250 = ssub.s32 %s16, 1
        // Predicated region
        $region13: #{tpu_custom_call.1} parent=11 // pred_check
          %p251 = pneg %p63
        $region14: #{tpu_custom_call.1} parent=11 // pred_check_branch
          %253 = sbr.rel (%p251) target = $region16
        $region15: #{tpu_custom_call.1} parent=11 // pred_region
          _
        $region16: #{tpu_custom_call.1} parent=11 // pred_fallthru
          _
        // Predicated region
        $region17: #{tpu_custom_call.1} parent=11 // pred_check
          %p254 = pneg %p84
        $region18: #{tpu_custom_call.1} parent=11 // pred_check_branch
          %256 = sbr.rel (%p254) target = $region20
        $region19: #{tpu_custom_call.1} parent=11 // pred_region
          _
        $region20: #{tpu_custom_call.1} parent=11 // pred_fallthru
          _
        // Predicated region
        $region21: #{tpu_custom_call.1} parent=11 // pred_check
          %p257 = pneg %p105
        $region22: #{tpu_custom_call.1} parent=11 // pred_check_branch
          %259 = sbr.rel (%p257) target = $region24
        $region23: #{tpu_custom_call.1} parent=11 // pred_region
          _
        $region24: #{tpu_custom_call.1} parent=11 // pred_fallthru
          _
        // Predicated region
        $region25: #{tpu_custom_call.1} parent=11 // pred_check
          %p260 = pneg %p126
        $region26: #{tpu_custom_call.1} parent=11 // pred_check_branch
          %262 = sbr.rel (%p260) target = $region28
        $region27: #{tpu_custom_call.1} parent=11 // pred_region
          _
        $region28: #{tpu_custom_call.1} parent=11 // pred_fallthru
          _
        // Predicated region
        $region29: #{tpu_custom_call.1} parent=11 // pred_check
          %p263 = pneg %p147
        $region30: #{tpu_custom_call.1} parent=11 // pred_check_branch
          %265 = sbr.rel (%p263) target = $region32
        $region31: #{tpu_custom_call.1} parent=11 // pred_region
          %s267 = ssub.s32 6144, 6144
          %268 = vsyncadd [#allocation3], %s267
          %s269 = sshll.u32 [#allocation2], 4
          %s270 = int_to_ptr.vmem [resolvable:$true] %s269
          %275 = dma.hbm_to_vmem [thread:$0]  %s5, 6144, %s270, [#allocation3], 128, 128, 8
        $region32: #{tpu_custom_call.1} parent=11 // pred_fallthru
          _
        // Predicated region
        $region33: #{tpu_custom_call.1} parent=11 // pred_check
          %p276 = pneg %p168
        $region34: #{tpu_custom_call.1} parent=11 // pred_check_branch
          %278 = sbr.rel (%p276) target = $region36
        $region35: #{tpu_custom_call.1} parent=11 // pred_region
          _
        $region36: #{tpu_custom_call.1} parent=11 // pred_fallthru
          _
        // Predicated region
        $region37: #{tpu_custom_call.1} parent=11 // pred_check
          %p279 = pneg %p189
        $region38: #{tpu_custom_call.1} parent=11 // pred_check_branch
          %281 = sbr.rel (%p279) target = $region40
        $region39: #{tpu_custom_call.1} parent=11 // pred_region
          _
        $region40: #{tpu_custom_call.1} parent=11 // pred_fallthru
          _
        // Predicated region
        $region41: #{tpu_custom_call.1} parent=11 // pred_check
          %p282 = pneg %p210
        $region42: #{tpu_custom_call.1} parent=11 // pred_check_branch
          %284 = sbr.rel (%p282) target = $region44
        $region43: #{tpu_custom_call.1} parent=11 // pred_region
          _
        $region44: #{tpu_custom_call.1} parent=11 // pred_fallthru
          _
      $region12: #{tpu_custom_call.1} parent=5 // pred_fallthru
        _
      %p285 = scmp.lt.s32.totalorder %s16, 2
      // Predicated region
      $region45: #{tpu_custom_call.1} parent=5 // pred_check
        %p286 = pneg %p285
      $region46: #{tpu_custom_call.1} parent=5 // pred_check_branch
        %288 = sbr.rel (%p286) target = $region48
      $region47: #{tpu_custom_call.1} parent=5 // pred_region
        // Predicated region
        $region49: #{tpu_custom_call.1} parent=47 // pred_check
          %p289 = pneg %p36
        $region50: #{tpu_custom_call.1} parent=47 // pred_check_branch
          %291 = sbr.rel (%p289) target = $region52
        $region51: #{tpu_custom_call.1} parent=47 // pred_region
          %s292 = smul.u32 16, %s16
          %p293 = scmp.lt.s32.totalorder %s292, 31
          %s294 = scalar_select %p293, %s292, 31
          %s295 = smul.addr %s294, 8
          %s296 = scalar_lea.vmem %s0, %s295
          %s297 = smul.u32 16, %s16
        $region52: #{tpu_custom_call.1} parent=47 // pred_fallthru
          _
      $region48: #{tpu_custom_call.1} parent=5 // pred_fallthru
        _
      %p298 = scmp.le.s32.totalorder 1, %s16
      %p299 = scmp.lt.s32.totalorder %s16, 3
      %p300 = pnand %p298, %p299
      %p301 = pneg %p300
      // Predicated region
      $region53: #{tpu_custom_call.1} parent=5 // pred_check
        _
      $region54: #{tpu_custom_call.1} parent=5 // pred_check_branch
        %303 = sbr.rel (%p300) target = $region56
      $region55: #{tpu_custom_call.1} parent=5 // pred_region
        %s304 = ssub.s32 %s16, 1
        // Predicated region
        $region57: #{tpu_custom_call.1} parent=55 // pred_check
          %p305 = pneg %p147
        $region58: #{tpu_custom_call.1} parent=55 // pred_check_branch
          %307 = sbr.rel (%p305) target = $region60
        $region59: #{tpu_custom_call.1} parent=55 // pred_region
          %308 = dma.done [#allocation3], 6144
        $region60: #{tpu_custom_call.1} parent=55 // pred_fallthru
          _
        %s309 = smul.u32 16, %s21
        %p310 = scmp.lt.s32.totalorder %s309, 31
        %s311 = scalar_select %p310, %s309, 31
        %s312 = smul.addr %s311, 8
        %s313 = scalar_lea.vmem %s0, %s312
        %p314 = pneg %p42
        %p315 = pneg %p39
        %p316 = pneg %p63
        %p317 = pneg %p60
        %p318 = pneg %p84
        %p319 = pneg %p81
        %p320 = pneg %p105
        %p321 = pneg %p102
        %p322 = pneg %p126
        %p323 = pneg %p123
        %p324 = pneg %p147
        %p325 = pneg %p144
        %p326 = pneg %p168
        %p327 = pneg %p165
        %p328 = pneg %p189
        %p329 = pneg %p186
        %p330 = pneg %p210
        %p331 = pneg %p207
        %p332 = pneg %p236
        %p333 = pneg %p233
        %s334 = smul.u32 16, %s21
        %p335 = scmp.lt.s32.totalorder %s334, 31
        %s336 = scalar_select %p335, %s334, 31
        %s337 = smul.addr %s336, 8
        %s338 = scalar_lea.vmem %s9, %s337
        %s339 = smul.u32 16, %s21
        %p340 = scmp.lt.s32.totalorder %s339, 31
        %s341 = scalar_select %p340, %s339, 31
        %s342 = smul.addr %s341, 8
        %s343 = scalar_lea.vmem %s0, %s342
        %s344 = smul.u32 16, %s21
        %s345 = smul.u32 16, %s21
        %p346 = scmp.lt.s32.totalorder %s345, 31
        %s347 = scalar_select %p346, %s345, 31
        %s348 = smul.addr %s347, 8
        %s349 = scalar_lea.vmem %s9, %s348
        %s350 = smul.u32 16, %s21
        %v351 = vld [vmem:[%s343] sm:$0xff]
        %v352 = vld [vmem:[%s343 + $0x8] sm:$0xff]
        %v353 = vld [vmem:[%s343 + $0x10] sm:$0xff]
        %v354 = vld [vmem:[%s343 + $0x18] sm:$0xff]
        %v355 = vld [vmem:[%s343 + $0x20] sm:$0xff]
        %v356 = vld [vmem:[%s343 + $0x28] sm:$0xff]
        %v357 = vld [vmem:[%s343 + $0x30] sm:$0xff]
        %v358 = vld [vmem:[%s343 + $0x38] sm:$0xff]
        %v359 = vld [vmem:[%s343 + $0x40] sm:$0xff]
        %v360 = vld [vmem:[%s343 + $0x48] sm:$0xff]
        %v361 = vld [vmem:[%s343 + $0x50] sm:$0xff]
        %v362 = vld [vmem:[%s343 + $0x58] sm:$0xff]
        %v363 = vld [vmem:[%s343 + $0x60] sm:$0xff]
        %v364 = vld [vmem:[%s343 + $0x68] sm:$0xff]
        %v365 = vld [vmem:[%s343 + $0x70] sm:$0xff]
        %v366 = vld [vmem:[%s343 + $0x78] sm:$0xff]
        %v367 = vld [vmem:[%s1] sm:$0x1]
        %369 = vset.pattern.permute.xlu0 0
        %370 = vperm.xlu0 %369, %v351
        %v371 = vpop.permute.xlu0 %370
        %374 = vset.pattern.permute.xlu0 0
        %375 = vperm.xlu0 %374, %v352
        %v376 = vpop.permute.xlu0 %375
        %379 = vset.pattern.permute.xlu0 0
        %380 = vperm.xlu0 %379, %v353
        %v381 = vpop.permute.xlu0 %380
        %384 = vset.pattern.permute.xlu0 0
        %385 = vperm.xlu0 %384, %v354
        %v386 = vpop.permute.xlu0 %385
        %389 = vset.pattern.permute.xlu0 0
        %390 = vperm.xlu0 %389, %v355
        %v391 = vpop.permute.xlu0 %390
        %394 = vset.pattern.permute.xlu0 0
        %395 = vperm.xlu0 %394, %v356
        %v396 = vpop.permute.xlu0 %395
        %399 = vset.pattern.permute.xlu0 0
        %400 = vperm.xlu0 %399, %v357
        %v401 = vpop.permute.xlu0 %400
        %404 = vset.pattern.permute.xlu0 0
        %405 = vperm.xlu0 %404, %v358
        %v406 = vpop.permute.xlu0 %405
        %409 = vset.pattern.permute.xlu0 0
        %410 = vperm.xlu0 %409, %v359
        %v411 = vpop.permute.xlu0 %410
        %414 = vset.pattern.permute.xlu0 0
        %415 = vperm.xlu0 %414, %v360
        %v416 = vpop.permute.xlu0 %415
        %419 = vset.pattern.permute.xlu0 0
        %420 = vperm.xlu0 %419, %v361
        %v421 = vpop.permute.xlu0 %420
        %424 = vset.pattern.permute.xlu0 0
        %425 = vperm.xlu0 %424, %v362
        %v426 = vpop.permute.xlu0 %425
        %429 = vset.pattern.permute.xlu0 0
        %430 = vperm.xlu0 %429, %v363
        %v431 = vpop.permute.xlu0 %430
        %434 = vset.pattern.permute.xlu0 0
        %435 = vperm.xlu0 %434, %v364
        %v436 = vpop.permute.xlu0 %435
        %439 = vset.pattern.permute.xlu0 0
        %440 = vperm.xlu0 %439, %v365
        %v441 = vpop.permute.xlu0 %440
        %444 = vset.pattern.permute.xlu0 0
        %445 = vperm.xlu0 %444, %v366
        %v446 = vpop.permute.xlu0 %445
        %v448 = vlaneseq
        %v449 = vshrl.u32 %v448, 7
        %v450 = vsub.s32 0, %v449
        %v451 = vrot.slane %v367, %v450
        %v452 = vmul.f32 %v371, %v451
        %v453 = vmul.f32 %v376, %v451
        %v454 = vmul.f32 %v381, %v451
        %v455 = vmul.f32 %v386, %v451
        %v456 = vmul.f32 %v391, %v451
        %v457 = vmul.f32 %v396, %v451
        %v458 = vmul.f32 %v401, %v451
        %v459 = vmul.f32 %v406, %v451
        %v460 = vmul.f32 %v411, %v451
        %v461 = vmul.f32 %v416, %v451
        %v462 = vmul.f32 %v421, %v451
        %v463 = vmul.f32 %v426, %v451
        %v464 = vmul.f32 %v431, %v451
        %v465 = vmul.f32 %v436, %v451
        %v466 = vmul.f32 %v441, %v451
        %v467 = vmul.f32 %v446, %v451
        %v468 = vld [vmem:[%s1 + $0x1] sm:$0x1]
        %469 = vset.pattern.permute.xlu0 1
        %470 = vperm.xlu0 %469, %v351
        %v471 = vpop.permute.xlu0 %470
        %473 = vset.pattern.permute.xlu0 1
        %474 = vperm.xlu0 %473, %v352
        %v475 = vpop.permute.xlu0 %474
        %477 = vset.pattern.permute.xlu0 1
        %478 = vperm.xlu0 %477, %v353
        %v479 = vpop.permute.xlu0 %478
        %481 = vset.pattern.permute.xlu0 1
        %482 = vperm.xlu0 %481, %v354
        %v483 = vpop.permute.xlu0 %482
        %485 = vset.pattern.permute.xlu0 1
        %486 = vperm.xlu0 %485, %v355
        %v487 = vpop.permute.xlu0 %486
        %489 = vset.pattern.permute.xlu0 1
        %490 = vperm.xlu0 %489, %v356
        %v491 = vpop.permute.xlu0 %490
        %493 = vset.pattern.permute.xlu0 1
        %494 = vperm.xlu0 %493, %v357
        %v495 = vpop.permute.xlu0 %494
        %497 = vset.pattern.permute.xlu0 1
        %498 = vperm.xlu0 %497, %v358
        %v499 = vpop.permute.xlu0 %498
        %501 = vset.pattern.permute.xlu0 1
        %502 = vperm.xlu0 %501, %v359
        %v503 = vpop.permute.xlu0 %502
        %505 = vset.pattern.permute.xlu0 1
        %506 = vperm.xlu0 %505, %v360
        %v507 = vpop.permute.xlu0 %506
        %509 = vset.pattern.permute.xlu0 1
        %510 = vperm.xlu0 %509, %v361
        %v511 = vpop.permute.xlu0 %510
        %513 = vset.pattern.permute.xlu0 1
        %514 = vperm.xlu0 %513, %v362
        %v515 = vpop.permute.xlu0 %514
        %517 = vset.pattern.permute.xlu0 1
        %518 = vperm.xlu0 %517, %v363
        %v519 = vpop.permute.xlu0 %518
        %521 = vset.pattern.permute.xlu0 1
        %522 = vperm.xlu0 %521, %v364
        %v523 = vpop.permute.xlu0 %522
        %525 = vset.pattern.permute.xlu0 1
        %526 = vperm.xlu0 %525, %v365
        %v527 = vpop.permute.xlu0 %526
        %529 = vset.pattern.permute.xlu0 1
        %530 = vperm.xlu0 %529, %v366
        %v531 = vpop.permute.xlu0 %530
        %v533 = vlaneseq
        %v534 = vshrl.u32 %v533, 7
        %v535 = vsub.s32 0, %v534
        %v536 = vrot.slane %v468, %v535
        %v537 = vmul.f32 %v471, %v536
        %v538 = vmul.f32 %v475, %v536
        %v539 = vmul.f32 %v479, %v536
        %v540 = vmul.f32 %v483, %v536
        %v541 = vmul.f32 %v487, %v536
        %v542 = vmul.f32 %v491, %v536
        %v543 = vmul.f32 %v495, %v536
        %v544 = vmul.f32 %v499, %v536
        %v545 = vmul.f32 %v503, %v536
        %v546 = vmul.f32 %v507, %v536
        %v547 = vmul.f32 %v511, %v536
        %v548 = vmul.f32 %v515, %v536
        %v549 = vmul.f32 %v519, %v536
        %v550 = vmul.f32 %v523, %v536
        %v551 = vmul.f32 %v527, %v536
        %v552 = vmul.f32 %v531, %v536
        %v553 = vadd.f32 %v452, %v537
        %v554 = vadd.f32 %v453, %v538
        %v555 = vadd.f32 %v454, %v539
        %v556 = vadd.f32 %v455, %v540
        %v557 = vadd.f32 %v456, %v541
        %v558 = vadd.f32 %v457, %v542
        %v559 = vadd.f32 %v458, %v543
        %v560 = vadd.f32 %v459, %v544
        %v561 = vadd.f32 %v460, %v545
        %v562 = vadd.f32 %v461, %v546
        %v563 = vadd.f32 %v462, %v547
        %v564 = vadd.f32 %v463, %v548
        %v565 = vadd.f32 %v464, %v549
        %v566 = vadd.f32 %v465, %v550
        %v567 = vadd.f32 %v466, %v551
        %v568 = vadd.f32 %v467, %v552
        %v569 = vld [vmem:[%s2] sm:$0x1]
        %v571 = vlaneseq
        %v572 = vshrl.u32 %v571, 7
        %v573 = vsub.s32 0, %v572
        %v574 = vrot.slane %v569, %v573
        %v576 = vadd.f32 %v553, %v574
        %v577 = vadd.f32 %v554, %v574
        %v578 = vadd.f32 %v555, %v574
        %v579 = vadd.f32 %v556, %v574
        %v580 = vadd.f32 %v557, %v574
        %v581 = vadd.f32 %v558, %v574
        %v582 = vadd.f32 %v559, %v574
        %v583 = vadd.f32 %v560, %v574
        %v584 = vadd.f32 %v561, %v574
        %v585 = vadd.f32 %v562, %v574
        %v586 = vadd.f32 %v563, %v574
        %v587 = vadd.f32 %v564, %v574
        %v588 = vadd.f32 %v565, %v574
        %v589 = vadd.f32 %v566, %v574
        %v590 = vadd.f32 %v567, %v574
        %v591 = vadd.f32 %v568, %v574
        %v592 = vtanh.pop %v576
        %v593 = vtanh.pop %v577
        %v594 = vtanh.pop %v578
        %v595 = vtanh.pop %v579
        %v596 = vtanh.pop %v580
        %v597 = vtanh.pop %v581
        %v598 = vtanh.pop %v582
        %v599 = vtanh.pop %v583
        %v600 = vtanh.pop %v584
        %v601 = vtanh.pop %v585
        %v602 = vtanh.pop %v586
        %v603 = vtanh.pop %v587
        %v604 = vtanh.pop %v588
        %v605 = vtanh.pop %v589
        %v606 = vtanh.pop %v590
        %v607 = vtanh.pop %v591
        %v608 = vld [vmem:[%s3] sm:$0xff]
        %v609 = vld [vmem:[%s3 + $0x8] sm:$0xff]
        %v610 = vld [vmem:[%s3 + $0x10] sm:$0xff]
        %v611 = vld [vmem:[%s3 + $0x18] sm:$0xff]
        %v612 = vld [vmem:[%s3 + $0x20] sm:$0xff]
        %v613 = vld [vmem:[%s3 + $0x28] sm:$0xff]
        %v614 = vld [vmem:[%s3 + $0x30] sm:$0xff]
        %v615 = vld [vmem:[%s3 + $0x38] sm:$0xff]
        %v616 = vld [vmem:[%s3 + $0x40] sm:$0xff]
        %v617 = vld [vmem:[%s3 + $0x48] sm:$0xff]
        %v618 = vld [vmem:[%s3 + $0x50] sm:$0xff]
        %v619 = vld [vmem:[%s3 + $0x58] sm:$0xff]
        %v620 = vld [vmem:[%s3 + $0x60] sm:$0xff]
        %v621 = vld [vmem:[%s3 + $0x68] sm:$0xff]
        %v622 = vld [vmem:[%s3 + $0x70] sm:$0xff]
        %v623 = vld [vmem:[%s3 + $0x78] sm:$0xff]
        %v624 = vld [vmem:[%s4] sm:$0x1]
        %v626 = vlaneseq
        %v627 = vshrl.u32 %v626, 7
        %v628 = vsub.s32 0, %v627
        %v629 = vrot.slane %v624, %v628
        %631 = vmatprep.subr.mxu0 0.0
        %632 = vmatpush1.msra.mxu0 %v608
        %633 = vmatprep.subr.mxu0 0.0
        %634 = vmatpush1.msra.mxu0 %v609
        %635 = vmatprep.subr.mxu0 0.0
        %636 = vmatpush1.msra.mxu0 %v610
        %637 = vmatprep.subr.mxu0 0.0
        %638 = vmatpush1.msra.mxu0 %v611
        %639 = vmatprep.subr.mxu0 0.0
        %640 = vmatpush1.msra.mxu0 %v612
        %641 = vmatprep.subr.mxu0 0.0
        %642 = vmatpush1.msra.mxu0 %v613
        %643 = vmatprep.subr.mxu0 0.0
        %644 = vmatpush1.msra.mxu0 %v614
        %645 = vmatprep.subr.mxu0 0.0
        %646 = vmatpush1.msra.mxu0 %v615
        %647 = vmatprep.subr.mxu0 0.0
        %648 = vmatpush1.msra.mxu0 %v616
        %649 = vmatprep.subr.mxu0 0.0
        %650 = vmatpush1.msra.mxu0 %v617
        %651 = vmatprep.subr.mxu0 0.0
        %652 = vmatpush1.msra.mxu0 %v618
        %653 = vmatprep.subr.mxu0 0.0
        %654 = vmatpush1.msra.mxu0 %v619
        %655 = vmatprep.subr.mxu0 0.0
        %656 = vmatpush1.msra.mxu0 %v620
        %657 = vmatprep.subr.mxu0 0.0
        %658 = vmatpush1.msra.mxu0 %v621
        %659 = vmatprep.subr.mxu0 0.0
        %660 = vmatpush1.msra.mxu0 %v622
        %661 = vmatprep.subr.mxu0 0.0
        %662 = vmatpush1.msra.mxu0 %v623
        %663 = vmatprep.subr.mxu0 0.0
        %664 = vmatpush1.msra.mxu0 0.0
        %665 = vmatprep.subr.mxu0 0.0
        %666 = vmatpush1.msra.mxu0 0.0
        %667 = vmatprep.subr.mxu0 0.0
        %668 = vmatpush1.msra.mxu0 0.0
        %669 = vmatprep.subr.mxu0 0.0
        %670 = vmatpush1.msra.mxu0 0.0
        %671 = vmatprep.subr.mxu0 0.0
        %672 = vmatpush1.msra.mxu0 0.0
        %673 = vmatprep.subr.mxu0 0.0
        %674 = vmatpush1.msra.mxu0 0.0
        %675 = vmatprep.subr.mxu0 0.0
        %676 = vmatpush1.msra.mxu0 0.0
        %677 = vmatprep.subr.mxu0 0.0
        %678 = vmatpush1.msra.mxu0 0.0
        %679 = vmatprep.subr.mxu0 0.0
        %680 = vmatpush1.msra.mxu0 0.0
        %681 = vmatprep.subr.mxu0 0.0
        %682 = vmatpush1.msra.mxu0 0.0
        %683 = vmatprep.subr.mxu0 0.0
        %684 = vmatpush1.msra.mxu0 0.0
        %685 = vmatprep.subr.mxu0 0.0
        %686 = vmatpush1.msra.mxu0 0.0
        %687 = vmatprep.subr.mxu0 0.0
        %688 = vmatpush1.msra.mxu0 0.0
        %689 = vmatprep.subr.mxu0 0.0
        %690 = vmatpush1.msra.mxu0 0.0
        %691 = vmatprep.subr.mxu0 0.0
        %692 = vmatpush1.msra.mxu0 0.0
        %693 = vmatprep.subr.mxu0 0.0
        %694 = vmatpush1.msra.mxu0 0.0
        %695 = vmatprep.mubr.f32.mxu0 0.0
        %696 = vmatmul.mubr.f32.gmra.mrb[0].mxu0 %v592
        %v697 = vpop.f32.mrb[0].mxu0
        %v698 = vadd.f32 %v629, %v697
        %v699 = vpop.f32.mrb[0].mxu0
        %700 = vmatprep.mubr.f32.mxu0 0.0
        %701 = vmatmul.mubr.f32.gmra.mrb[0].mxu0 %v593
        %v702 = vpop.f32.mrb[0].mxu0
        %v703 = vadd.f32 %v629, %v702
        %v704 = vpop.f32.mrb[0].mxu0
        %705 = vmatprep.mubr.f32.mxu0 0.0
        %706 = vmatmul.mubr.f32.gmra.mrb[0].mxu0 %v594
        %v707 = vpop.f32.mrb[0].mxu0
        %v708 = vadd.f32 %v629, %v707
        %v709 = vpop.f32.mrb[0].mxu0
        %710 = vmatprep.mubr.f32.mxu0 0.0
        %711 = vmatmul.mubr.f32.gmra.mrb[0].mxu0 %v595
        %v712 = vpop.f32.mrb[0].mxu0
        %v713 = vadd.f32 %v629, %v712
        %v714 = vpop.f32.mrb[0].mxu0
        %715 = vmatprep.mubr.f32.mxu0 0.0
        %716 = vmatmul.mubr.f32.gmra.mrb[0].mxu0 %v596
        %v717 = vpop.f32.mrb[0].mxu0
        %v718 = vadd.f32 %v629, %v717
        %v719 = vpop.f32.mrb[0].mxu0
        %720 = vmatprep.mubr.f32.mxu0 0.0
        %721 = vmatmul.mubr.f32.gmra.mrb[0].mxu0 %v597
        %v722 = vpop.f32.mrb[0].mxu0
        %v723 = vadd.f32 %v629, %v722
        %v724 = vpop.f32.mrb[0].mxu0
        %725 = vmatprep.mubr.f32.mxu0 0.0
        %726 = vmatmul.mubr.f32.gmra.mrb[0].mxu0 %v598
        %v727 = vpop.f32.mrb[0].mxu0
        %v728 = vadd.f32 %v629, %v727
        %v729 = vpop.f32.mrb[0].mxu0
        %730 = vmatprep.mubr.f32.mxu0 0.0
        %731 = vmatmul.mubr.f32.gmra.mrb[0].mxu0 %v599
        %v732 = vpop.f32.mrb[0].mxu0
        %v733 = vadd.f32 %v629, %v732
        %v734 = vpop.f32.mrb[0].mxu0
        %735 = vmatprep.mubr.f32.mxu0 0.0
        %736 = vmatmul.mubr.f32.gmra.mrb[0].mxu0 %v600
        %v737 = vpop.f32.mrb[0].mxu0
        %v738 = vadd.f32 %v629, %v737
        %v739 = vpop.f32.mrb[0].mxu0
        %740 = vmatprep.mubr.f32.mxu0 0.0
        %741 = vmatmul.mubr.f32.gmra.mrb[0].mxu0 %v601
        %v742 = vpop.f32.mrb[0].mxu0
        %v743 = vadd.f32 %v629, %v742
        %v744 = vpop.f32.mrb[0].mxu0
        %745 = vmatprep.mubr.f32.mxu0 0.0
        %746 = vmatmul.mubr.f32.gmra.mrb[0].mxu0 %v602
        %v747 = vpop.f32.mrb[0].mxu0
        %v748 = vadd.f32 %v629, %v747
        %v749 = vpop.f32.mrb[0].mxu0
        %750 = vmatprep.mubr.f32.mxu0 0.0
        %751 = vmatmul.mubr.f32.gmra.mrb[0].mxu0 %v603
        %v752 = vpop.f32.mrb[0].mxu0
        %v753 = vadd.f32 %v629, %v752
        %v754 = vpop.f32.mrb[0].mxu0
        %755 = vmatprep.mubr.f32.mxu0 0.0
        %756 = vmatmul.mubr.f32.gmra.mrb[0].mxu0 %v604
        %v757 = vpop.f32.mrb[0].mxu0
        %v758 = vadd.f32 %v629, %v757
        %v759 = vpop.f32.mrb[0].mxu0
        %760 = vmatprep.mubr.f32.mxu0 0.0
        %761 = vmatmul.mubr.f32.gmra.mrb[0].mxu0 %v605
        %v762 = vpop.f32.mrb[0].mxu0
        %v763 = vadd.f32 %v629, %v762
        %v764 = vpop.f32.mrb[0].mxu0
        %765 = vmatprep.mubr.f32.mxu0 0.0
        %766 = vmatmul.mubr.f32.gmra.mrb[0].mxu0 %v606
        %v767 = vpop.f32.mrb[0].mxu0
        %v768 = vadd.f32 %v629, %v767
        %v769 = vpop.f32.mrb[0].mxu0
        %770 = vmatprep.mubr.f32.mxu0 0.0
        %771 = vmatmul.mubr.f32.gmra.mrb[0].mxu0 %v607
        %v772 = vpop.f32.mrb[0].mxu0
        %v773 = vadd.f32 %v629, %v772
        %v774 = vpop.f32.mrb[0].mxu0
        %775 = vdwg.mxu0
        %v776 = vtanh.pop %v698
        %v777 = vtanh.pop %v703
        %v778 = vtanh.pop %v708
        %v779 = vtanh.pop %v713
        %v780 = vtanh.pop %v718
        %v781 = vtanh.pop %v723
        %v782 = vtanh.pop %v728
        %v783 = vtanh.pop %v733
        %v784 = vtanh.pop %v738
        %v785 = vtanh.pop %v743
        %v786 = vtanh.pop %v748
        %v787 = vtanh.pop %v753
        %v788 = vtanh.pop %v758
        %v789 = vtanh.pop %v763
        %v790 = vtanh.pop %v768
        %v791 = vtanh.pop %v773
        %v792 = vld [vmem:[#allocation2] sm:$0xff]
        %v793 = vld [vmem:[#allocation2 + $0x8] sm:$0xff]
        %v794 = vld [vmem:[#allocation2 + $0x10] sm:$0xff]
        %v795 = vld [vmem:[#allocation2 + $0x18] sm:$0xff]
        %v796 = vld [vmem:[#allocation2 + $0x20] sm:$0xff]
        %v797 = vld [vmem:[#allocation2 + $0x28] sm:$0xff]
        %v798 = vld [vmem:[#allocation2 + $0x30] sm:$0xff]
        %v799 = vld [vmem:[#allocation2 + $0x38] sm:$0xff]
        %v800 = vld [vmem:[#allocation2 + $0x40] sm:$0xff]
        %v801 = vld [vmem:[#allocation2 + $0x48] sm:$0xff]
        %v802 = vld [vmem:[#allocation2 + $0x50] sm:$0xff]
        %v803 = vld [vmem:[#allocation2 + $0x58] sm:$0xff]
        %v804 = vld [vmem:[#allocation2 + $0x60] sm:$0xff]
        %v805 = vld [vmem:[#allocation2 + $0x68] sm:$0xff]
        %v806 = vld [vmem:[#allocation2 + $0x70] sm:$0xff]
        %v807 = vld [vmem:[#allocation2 + $0x78] sm:$0xff]
        %808 = vmatprep.subr.mxu0 0.0
        %809 = vmatpush1.msra.mxu0 %v792
        %810 = vmatprep.subr.mxu0 0.0
        %811 = vmatpush1.msra.mxu0 %v793
        %812 = vmatprep.subr.mxu0 0.0
        %813 = vmatpush1.msra.mxu0 %v794
        %814 = vmatprep.subr.mxu0 0.0
        %815 = vmatpush1.msra.mxu0 %v795
        %816 = vmatprep.subr.mxu0 0.0
        %817 = vmatpush1.msra.mxu0 %v796
        %818 = vmatprep.subr.mxu0 0.0
        %819 = vmatpush1.msra.mxu0 %v797
        %820 = vmatprep.subr.mxu0 0.0
        %821 = vmatpush1.msra.mxu0 %v798
        %822 = vmatprep.subr.mxu0 0.0
        %823 = vmatpush1.msra.mxu0 %v799
        %824 = vmatprep.subr.mxu0 0.0
        %825 = vmatpush1.msra.mxu0 %v800
        %826 = vmatprep.subr.mxu0 0.0
        %827 = vmatpush1.msra.mxu0 %v801
        %828 = vmatprep.subr.mxu0 0.0
        %829 = vmatpush1.msra.mxu0 %v802
        %830 = vmatprep.subr.mxu0 0.0
        %831 = vmatpush1.msra.mxu0 %v803
        %832 = vmatprep.subr.mxu0 0.0
        %833 = vmatpush1.msra.mxu0 %v804
        %834 = vmatprep.subr.mxu0 0.0
        %835 = vmatpush1.msra.mxu0 %v805
        %836 = vmatprep.subr.mxu0 0.0
        %837 = vmatpush1.msra.mxu0 %v806
        %838 = vmatprep.subr.mxu0 0.0
        %839 = vmatpush1.msra.mxu0 %v807
        %840 = vmatprep.subr.mxu0 0.0
        %841 = vmatpush1.msra.mxu0 0.0
        %842 = vmatprep.subr.mxu0 0.0
        %843 = vmatpush1.msra.mxu0 0.0
        %844 = vmatprep.subr.mxu0 0.0
        %845 = vmatpush1.msra.mxu0 0.0
        %846 = vmatprep.subr.mxu0 0.0
        %847 = vmatpush1.msra.mxu0 0.0
        %848 = vmatprep.subr.mxu0 0.0
        %849 = vmatpush1.msra.mxu0 0.0
        %850 = vmatprep.subr.mxu0 0.0
        %851 = vmatpush1.msra.mxu0 0.0
        %852 = vmatprep.subr.mxu0 0.0
        %853 = vmatpush1.msra.mxu0 0.0
        %854 = vmatprep.subr.mxu0 0.0
        %855 = vmatpush1.msra.mxu0 0.0
        %856 = vmatprep.subr.mxu0 0.0
        %857 = vmatpush1.msra.mxu0 0.0
        %858 = vmatprep.subr.mxu0 0.0
        %859 = vmatpush1.msra.mxu0 0.0
        %860 = vmatprep.subr.mxu0 0.0
        %861 = vmatpush1.msra.mxu0 0.0
        %862 = vmatprep.subr.mxu0 0.0
        %863 = vmatpush1.msra.mxu0 0.0
        %864 = vmatprep.subr.mxu0 0.0
        %865 = vmatpush1.msra.mxu0 0.0
        %866 = vmatprep.subr.mxu0 0.0
        %867 = vmatpush1.msra.mxu0 0.0
        %868 = vmatprep.subr.mxu0 0.0
        %869 = vmatpush1.msra.mxu0 0.0
        %870 = vmatprep.subr.mxu0 0.0
        %871 = vmatpush1.msra.mxu0 0.0
        %872 = vmatprep.mubr.f32.mxu0 0.0
        %873 = vmatmul.mubr.f32.gmra.mrb[0].mxu0 %v776
        %v874 = vpop.f32.mrb[0].mxu0
        %v875 = vadd.f32 0.0, %v874
        %v876 = vpop.f32.mrb[0].mxu0
        %877 = vmatprep.mubr.f32.mxu0 0.0
        %878 = vmatmul.mubr.f32.gmra.mrb[0].mxu0 %v777
        %v879 = vpop.f32.mrb[0].mxu0
        %v880 = vadd.f32 0.0, %v879
        %v881 = vpop.f32.mrb[0].mxu0
        %882 = vmatprep.mubr.f32.mxu0 0.0
        %883 = vmatmul.mubr.f32.gmra.mrb[0].mxu0 %v778
        %v884 = vpop.f32.mrb[0].mxu0
        %v885 = vadd.f32 0.0, %v884
        %v886 = vpop.f32.mrb[0].mxu0
        %887 = vmatprep.mubr.f32.mxu0 0.0
        %888 = vmatmul.mubr.f32.gmra.mrb[0].mxu0 %v779
        %v889 = vpop.f32.mrb[0].mxu0
        %v890 = vadd.f32 0.0, %v889
        %v891 = vpop.f32.mrb[0].mxu0
        %892 = vmatprep.mubr.f32.mxu0 0.0
        %893 = vmatmul.mubr.f32.gmra.mrb[0].mxu0 %v780
        %v894 = vpop.f32.mrb[0].mxu0
        %v895 = vadd.f32 0.0, %v894
        %v896 = vpop.f32.mrb[0].mxu0
        %897 = vmatprep.mubr.f32.mxu0 0.0
        %898 = vmatmul.mubr.f32.gmra.mrb[0].mxu0 %v781
        %v899 = vpop.f32.mrb[0].mxu0
        %v900 = vadd.f32 0.0, %v899
        %v901 = vpop.f32.mrb[0].mxu0
        %902 = vmatprep.mubr.f32.mxu0 0.0
        %903 = vmatmul.mubr.f32.gmra.mrb[0].mxu0 %v782
        %v904 = vpop.f32.mrb[0].mxu0
        %v905 = vadd.f32 0.0, %v904
        %v906 = vpop.f32.mrb[0].mxu0
        %907 = vmatprep.mubr.f32.mxu0 0.0
        %908 = vmatmul.mubr.f32.gmra.mrb[0].mxu0 %v783
        %v909 = vpop.f32.mrb[0].mxu0
        %v910 = vadd.f32 0.0, %v909
        %v911 = vpop.f32.mrb[0].mxu0
        %912 = vmatprep.mubr.f32.mxu0 0.0
        %913 = vmatmul.mubr.f32.gmra.mrb[0].mxu0 %v784
        %v914 = vpop.f32.mrb[0].mxu0
        %v915 = vadd.f32 0.0, %v914
        %v916 = vpop.f32.mrb[0].mxu0
        %917 = vmatprep.mubr.f32.mxu0 0.0
        %918 = vmatmul.mubr.f32.gmra.mrb[0].mxu0 %v785
        %v919 = vpop.f32.mrb[0].mxu0
        %v920 = vadd.f32 0.0, %v919
        %v921 = vpop.f32.mrb[0].mxu0
        %922 = vmatprep.mubr.f32.mxu0 0.0
        %923 = vmatmul.mubr.f32.gmra.mrb[0].mxu0 %v786
        %v924 = vpop.f32.mrb[0].mxu0
        %v925 = vadd.f32 0.0, %v924
        %v926 = vpop.f32.mrb[0].mxu0
        %927 = vmatprep.mubr.f32.mxu0 0.0
        %928 = vmatmul.mubr.f32.gmra.mrb[0].mxu0 %v787
        %v929 = vpop.f32.mrb[0].mxu0
        %v930 = vadd.f32 0.0, %v929
        %v931 = vpop.f32.mrb[0].mxu0
        %932 = vmatprep.mubr.f32.mxu0 0.0
        %933 = vmatmul.mubr.f32.gmra.mrb[0].mxu0 %v788
        %v934 = vpop.f32.mrb[0].mxu0
        %v935 = vadd.f32 0.0, %v934
        %v936 = vpop.f32.mrb[0].mxu0
        %937 = vmatprep.mubr.f32.mxu0 0.0
        %938 = vmatmul.mubr.f32.gmra.mrb[0].mxu0 %v789
        %v939 = vpop.f32.mrb[0].mxu0
        %v940 = vadd.f32 0.0, %v939
        %v941 = vpop.f32.mrb[0].mxu0
        %942 = vmatprep.mubr.f32.mxu0 0.0
        %943 = vmatmul.mubr.f32.gmra.mrb[0].mxu0 %v790
        %v944 = vpop.f32.mrb[0].mxu0
        %v945 = vadd.f32 0.0, %v944
        %v946 = vpop.f32.mrb[0].mxu0
        %947 = vmatprep.mubr.f32.mxu0 0.0
        %948 = vmatmul.mubr.f32.gmra.mrb[0].mxu0 %v791
        %v949 = vpop.f32.mrb[0].mxu0
        %v950 = vadd.f32 0.0, %v949
        %v951 = vpop.f32.mrb[0].mxu0
        %952 = vdwg.mxu0
        %v953 = vadd.f32 %v592, %v875
        %v954 = vadd.f32 %v593, %v880
        %v955 = vadd.f32 %v594, %v885
        %v956 = vadd.f32 %v595, %v890
        %v957 = vadd.f32 %v596, %v895
        %v958 = vadd.f32 %v597, %v900
        %v959 = vadd.f32 %v598, %v905
        %v960 = vadd.f32 %v599, %v910
        %v961 = vadd.f32 %v600, %v915
        %v962 = vadd.f32 %v601, %v920
        %v963 = vadd.f32 %v602, %v925
        %v964 = vadd.f32 %v603, %v930
        %v965 = vadd.f32 %v604, %v935
        %v966 = vadd.f32 %v605, %v940
        %v967 = vadd.f32 %v606, %v945
        %v968 = vadd.f32 %v607, %v950
        %v969 = vld [vmem:[%s6] sm:$0x1]
        %v971 = vlaneseq
        %v972 = vshrl.u32 %v971, 7
        %v973 = vsub.s32 0, %v972
        %v974 = vrot.slane %v969, %v973
        %v976 = vadd.f32 %v953, %v974
        %v977 = vadd.f32 %v954, %v974
        %v978 = vadd.f32 %v955, %v974
        %v979 = vadd.f32 %v956, %v974
        %v980 = vadd.f32 %v957, %v974
        %v981 = vadd.f32 %v958, %v974
        %v982 = vadd.f32 %v959, %v974
        %v983 = vadd.f32 %v960, %v974
        %v984 = vadd.f32 %v961, %v974
        %v985 = vadd.f32 %v962, %v974
        %v986 = vadd.f32 %v963, %v974
        %v987 = vadd.f32 %v964, %v974
        %v988 = vadd.f32 %v965, %v974
        %v989 = vadd.f32 %v966, %v974
        %v990 = vadd.f32 %v967, %v974
        %v991 = vadd.f32 %v968, %v974
        %s992 = scalar_lea.vmem %s3, 128
        %v993 = vld [vmem:[%s992] sm:$0xff]
        %v994 = vld [vmem:[%s992 + $0x8] sm:$0xff]
        %v995 = vld [vmem:[%s992 + $0x10] sm:$0xff]
        %v996 = vld [vmem:[%s992 + $0x18] sm:$0xff]
        %v997 = vld [vmem:[%s992 + $0x20] sm:$0xff]
        %v998 = vld [vmem:[%s992 + $0x28] sm:$0xff]
        %v999 = vld [vmem:[%s992 + $0x30] sm:$0xff]
        %v1000 = vld [vmem:[%s992 + $0x38] sm:$0xff]
        %v1001 = vld [vmem:[%s992 + $0x40] sm:$0xff]
        %v1002 = vld [vmem:[%s992 + $0x48] sm:$0xff]
        %v1003 = vld [vmem:[%s992 + $0x50] sm:$0xff]
        %v1004 = vld [vmem:[%s992 + $0x58] sm:$0xff]
        %v1005 = vld [vmem:[%s992 + $0x60] sm:$0xff]
        %v1006 = vld [vmem:[%s992 + $0x68] sm:$0xff]
        %v1007 = vld [vmem:[%s992 + $0x70] sm:$0xff]
        %v1008 = vld [vmem:[%s992 + $0x78] sm:$0xff]
        %s1009 = scalar_lea.vmem %s4, 1
        %v1010 = vld [vmem:[%s1009] sm:$0x1]
        %v1012 = vlaneseq
        %v1013 = vshrl.u32 %v1012, 7
        %v1014 = vsub.s32 0, %v1013
        %v1015 = vrot.slane %v1010, %v1014
        %1017 = vmatprep.subr.mxu0 0.0
        %1018 = vmatpush1.msra.mxu0 %v993
        %1019 = vmatprep.subr.mxu0 0.0
        %1020 = vmatpush1.msra.mxu0 %v994
        %1021 = vmatprep.subr.mxu0 0.0
        %1022 = vmatpush1.msra.mxu0 %v995
        %1023 = vmatprep.subr.mxu0 0.0
        %1024 = vmatpush1.msra.mxu0 %v996
        %1025 = vmatprep.subr.mxu0 0.0
        %1026 = vmatpush1.msra.mxu0 %v997
        %1027 = vmatprep.subr.mxu0 0.0
        %1028 = vmatpush1.msra.mxu0 %v998
        %1029 = vmatprep.subr.mxu0 0.0
        %1030 = vmatpush1.msra.mxu0 %v999
        %1031 = vmatprep.subr.mxu0 0.0
        %1032 = vmatpush1.msra.mxu0 %v1000
        %1033 = vmatprep.subr.mxu0 0.0
        %1034 = vmatpush1.msra.mxu0 %v1001
        %1035 = vmatprep.subr.mxu0 0.0
        %1036 = vmatpush1.msra.mxu0 %v1002
        %1037 = vmatprep.subr.mxu0 0.0
        %1038 = vmatpush1.msra.mxu0 %v1003
        %1039 = vmatprep.subr.mxu0 0.0
        %1040 = vmatpush1.msra.mxu0 %v1004
        %1041 = vmatprep.subr.mxu0 0.0
        %1042 = vmatpush1.msra.mxu0 %v1005
        %1043 = vmatprep.subr.mxu0 0.0
        %1044 = vmatpush1.msra.mxu0 %v1006
        %1045 = vmatprep.subr.mxu0 0.0
        %1046 = vmatpush1.msra.mxu0 %v1007
        %1047 = vmatprep.subr.mxu0 0.0
        %1048 = vmatpush1.msra.mxu0 %v1008
        %1049 = vmatprep.subr.mxu0 0.0
        %1050 = vmatpush1.msra.mxu0 0.0
        %1051 = vmatprep.subr.mxu0 0.0
        %1052 = vmatpush1.msra.mxu0 0.0
        %1053 = vmatprep.subr.mxu0 0.0
        %1054 = vmatpush1.msra.mxu0 0.0
        %1055 = vmatprep.subr.mxu0 0.0
        %1056 = vmatpush1.msra.mxu0 0.0
        %1057 = vmatprep.subr.mxu0 0.0
        %1058 = vmatpush1.msra.mxu0 0.0
        %1059 = vmatprep.subr.mxu0 0.0
        %1060 = vmatpush1.msra.mxu0 0.0
        %1061 = vmatprep.subr.mxu0 0.0
        %1062 = vmatpush1.msra.mxu0 0.0
        %1063 = vmatprep.subr.mxu0 0.0
        %1064 = vmatpush1.msra.mxu0 0.0
        %1065 = vmatprep.subr.mxu0 0.0
        %1066 = vmatpush1.msra.mxu0 0.0
        %1067 = vmatprep.subr.mxu0 0.0
        %1068 = vmatpush1.msra.mxu0 0.0
        %1069 = vmatprep.subr.mxu0 0.0
        %1070 = vmatpush1.msra.mxu0 0.0
        %1071 = vmatprep.subr.mxu0 0.0
        %1072 = vmatpush1.msra.mxu0 0.0
        %1073 = vmatprep.subr.mxu0 0.0
        %1074 = vmatpush1.msra.mxu0 0.0
        %1075 = vmatprep.subr.mxu0 0.0
        %1076 = vmatpush1.msra.mxu0 0.0
        %1077 = vmatprep.subr.mxu0 0.0
        %1078 = vmatpush1.msra.mxu0 0.0
        %1079 = vmatprep.subr.mxu0 0.0
        %1080 = vmatpush1.msra.mxu0 0.0
        %1081 = vmatprep.mubr.f32.mxu0 0.0
        %1082 = vmatmul.mubr.f32.gmra.mrb[0].mxu0 %v976
        %v1083 = vpop.f32.mrb[0].mxu0
        %v1084 = vadd.f32 %v1015, %v1083
        %v1085 = vpop.f32.mrb[0].mxu0
        %1086 = vmatprep.mubr.f32.mxu0 0.0
        %1087 = vmatmul.mubr.f32.gmra.mrb[0].mxu0 %v977
        %v1088 = vpop.f32.mrb[0].mxu0
        %v1089 = vadd.f32 %v1015, %v1088
        %v1090 = vpop.f32.mrb[0].mxu0
        %1091 = vmatprep.mubr.f32.mxu0 0.0
        %1092 = vmatmul.mubr.f32.gmra.mrb[0].mxu0 %v978
        %v1093 = vpop.f32.mrb[0].mxu0
        %v1094 = vadd.f32 %v1015, %v1093
        %v1095 = vpop.f32.mrb[0].mxu0
        %1096 = vmatprep.mubr.f32.mxu0 0.0
        %1097 = vmatmul.mubr.f32.gmra.mrb[0].mxu0 %v979
        %v1098 = vpop.f32.mrb[0].mxu0
        %v1099 = vadd.f32 %v1015, %v1098
        %v1100 = vpop.f32.mrb[0].mxu0
        %1101 = vmatprep.mubr.f32.mxu0 0.0
        %1102 = vmatmul.mubr.f32.gmra.mrb[0].mxu0 %v980
        %v1103 = vpop.f32.mrb[0].mxu0
        %v1104 = vadd.f32 %v1015, %v1103
        %v1105 = vpop.f32.mrb[0].mxu0
        %1106 = vmatprep.mubr.f32.mxu0 0.0
        %1107 = vmatmul.mubr.f32.gmra.mrb[0].mxu0 %v981
        %v1108 = vpop.f32.mrb[0].mxu0
        %v1109 = vadd.f32 %v1015, %v1108
        %v1110 = vpop.f32.mrb[0].mxu0
        %1111 = vmatprep.mubr.f32.mxu0 0.0
        %1112 = vmatmul.mubr.f32.gmra.mrb[0].mxu0 %v982
        %v1113 = vpop.f32.mrb[0].mxu0
        %v1114 = vadd.f32 %v1015, %v1113
        %v1115 = vpop.f32.mrb[0].mxu0
        %1116 = vmatprep.mubr.f32.mxu0 0.0
        %1117 = vmatmul.mubr.f32.gmra.mrb[0].mxu0 %v983
        %v1118 = vpop.f32.mrb[0].mxu0
        %v1119 = vadd.f32 %v1015, %v1118
        %v1120 = vpop.f32.mrb[0].mxu0
        %1121 = vmatprep.mubr.f32.mxu0 0.0
        %1122 = vmatmul.mubr.f32.gmra.mrb[0].mxu0 %v984
        %v1123 = vpop.f32.mrb[0].mxu0
        %v1124 = vadd.f32 %v1015, %v1123
        %v1125 = vpop.f32.mrb[0].mxu0
        %1126 = vmatprep.mubr.f32.mxu0 0.0
        %1127 = vmatmul.mubr.f32.gmra.mrb[0].mxu0 %v985
        %v1128 = vpop.f32.mrb[0].mxu0
        %v1129 = vadd.f32 %v1015, %v1128
        %v1130 = vpop.f32.mrb[0].mxu0
        %1131 = vmatprep.mubr.f32.mxu0 0.0
        %1132 = vmatmul.mubr.f32.gmra.mrb[0].mxu0 %v986
        %v1133 = vpop.f32.mrb[0].mxu0
        %v1134 = vadd.f32 %v1015, %v1133
        %v1135 = vpop.f32.mrb[0].mxu0
        %1136 = vmatprep.mubr.f32.mxu0 0.0
        %1137 = vmatmul.mubr.f32.gmra.mrb[0].mxu0 %v987
        %v1138 = vpop.f32.mrb[0].mxu0
        %v1139 = vadd.f32 %v1015, %v1138
        %v1140 = vpop.f32.mrb[0].mxu0
        %1141 = vmatprep.mubr.f32.mxu0 0.0
        %1142 = vmatmul.mubr.f32.gmra.mrb[0].mxu0 %v988
        %v1143 = vpop.f32.mrb[0].mxu0
        %v1144 = vadd.f32 %v1015, %v1143
        %v1145 = vpop.f32.mrb[0].mxu0
        %1146 = vmatprep.mubr.f32.mxu0 0.0
        %1147 = vmatmul.mubr.f32.gmra.mrb[0].mxu0 %v989
        %v1148 = vpop.f32.mrb[0].mxu0
        %v1149 = vadd.f32 %v1015, %v1148
        %v1150 = vpop.f32.mrb[0].mxu0
        %1151 = vmatprep.mubr.f32.mxu0 0.0
        %1152 = vmatmul.mubr.f32.gmra.mrb[0].mxu0 %v990
        %v1153 = vpop.f32.mrb[0].mxu0
        %v1154 = vadd.f32 %v1015, %v1153
        %v1155 = vpop.f32.mrb[0].mxu0
        %1156 = vmatprep.mubr.f32.mxu0 0.0
        %1157 = vmatmul.mubr.f32.gmra.mrb[0].mxu0 %v991
        %v1158 = vpop.f32.mrb[0].mxu0
        %v1159 = vadd.f32 %v1015, %v1158
        %v1160 = vpop.f32.mrb[0].mxu0
        %1161 = vdwg.mxu0
        %v1162 = vtanh.pop %v1084
        %v1163 = vtanh.pop %v1089
        %v1164 = vtanh.pop %v1094
        %v1165 = vtanh.pop %v1099
        %v1166 = vtanh.pop %v1104
        %v1167 = vtanh.pop %v1109
        %v1168 = vtanh.pop %v1114
        %v1169 = vtanh.pop %v1119
        %v1170 = vtanh.pop %v1124
        %v1171 = vtanh.pop %v1129
        %v1172 = vtanh.pop %v1134
        %v1173 = vtanh.pop %v1139
        %v1174 = vtanh.pop %v1144
        %v1175 = vtanh.pop %v1149
        %v1176 = vtanh.pop %v1154
        %v1177 = vtanh.pop %v1159
        %s1178 = scalar_lea.vmem [#allocation2], 128
        %v1179 = vld [vmem:[%s1178] sm:$0xff]
        %v1180 = vld [vmem:[%s1178 + $0x8] sm:$0xff]
        %v1181 = vld [vmem:[%s1178 + $0x10] sm:$0xff]
        %v1182 = vld [vmem:[%s1178 + $0x18] sm:$0xff]
        %v1183 = vld [vmem:[%s1178 + $0x20] sm:$0xff]
        %v1184 = vld [vmem:[%s1178 + $0x28] sm:$0xff]
        %v1185 = vld [vmem:[%s1178 + $0x30] sm:$0xff]
        %v1186 = vld [vmem:[%s1178 + $0x38] sm:$0xff]
        %v1187 = vld [vmem:[%s1178 + $0x40] sm:$0xff]
        %v1188 = vld [vmem:[%s1178 + $0x48] sm:$0xff]
        %v1189 = vld [vmem:[%s1178 + $0x50] sm:$0xff]
        %v1190 = vld [vmem:[%s1178 + $0x58] sm:$0xff]
        %v1191 = vld [vmem:[%s1178 + $0x60] sm:$0xff]
        %v1192 = vld [vmem:[%s1178 + $0x68] sm:$0xff]
        %v1193 = vld [vmem:[%s1178 + $0x70] sm:$0xff]
        %v1194 = vld [vmem:[%s1178 + $0x78] sm:$0xff]
        %1195 = vmatprep.subr.mxu0 0.0
        %1196 = vmatpush1.msra.mxu0 %v1179
        %1197 = vmatprep.subr.mxu0 0.0
        %1198 = vmatpush1.msra.mxu0 %v1180
        %1199 = vmatprep.subr.mxu0 0.0
        %1200 = vmatpush1.msra.mxu0 %v1181
        %1201 = vmatprep.subr.mxu0 0.0
        %1202 = vmatpush1.msra.mxu0 %v1182
        %1203 = vmatprep.subr.mxu0 0.0
        %1204 = vmatpush1.msra.mxu0 %v1183
        %1205 = vmatprep.subr.mxu0 0.0
        %1206 = vmatpush1.msra.mxu0 %v1184
        %1207 = vmatprep.subr.mxu0 0.0
        %1208 = vmatpush1.msra.mxu0 %v1185
        %1209 = vmatprep.subr.mxu0 0.0
        %1210 = vmatpush1.msra.mxu0 %v1186
        %1211 = vmatprep.subr.mxu0 0.0
        %1212 = vmatpush1.msra.mxu0 %v1187
        %1213 = vmatprep.subr.mxu0 0.0
        %1214 = vmatpush1.msra.mxu0 %v1188
        %1215 = vmatprep.subr.mxu0 0.0
        %1216 = vmatpush1.msra.mxu0 %v1189
        %1217 = vmatprep.subr.mxu0 0.0
        %1218 = vmatpush1.msra.mxu0 %v1190
        %1219 = vmatprep.subr.mxu0 0.0
        %1220 = vmatpush1.msra.mxu0 %v1191
        %1221 = vmatprep.subr.mxu0 0.0
        %1222 = vmatpush1.msra.mxu0 %v1192
        %1223 = vmatprep.subr.mxu0 0.0
        %1224 = vmatpush1.msra.mxu0 %v1193
        %1225 = vmatprep.subr.mxu0 0.0
        %1226 = vmatpush1.msra.mxu0 %v1194
        %1227 = vmatprep.subr.mxu0 0.0
        %1228 = vmatpush1.msra.mxu0 0.0
        %1229 = vmatprep.subr.mxu0 0.0
        %1230 = vmatpush1.msra.mxu0 0.0
        %1231 = vmatprep.subr.mxu0 0.0
        %1232 = vmatpush1.msra.mxu0 0.0
        %1233 = vmatprep.subr.mxu0 0.0
        %1234 = vmatpush1.msra.mxu0 0.0
        %1235 = vmatprep.subr.mxu0 0.0
        %1236 = vmatpush1.msra.mxu0 0.0
        %1237 = vmatprep.subr.mxu0 0.0
        %1238 = vmatpush1.msra.mxu0 0.0
        %1239 = vmatprep.subr.mxu0 0.0
        %1240 = vmatpush1.msra.mxu0 0.0
        %1241 = vmatprep.subr.mxu0 0.0
        %1242 = vmatpush1.msra.mxu0 0.0
        %1243 = vmatprep.subr.mxu0 0.0
        %1244 = vmatpush1.msra.mxu0 0.0
        %1245 = vmatprep.subr.mxu0 0.0
        %1246 = vmatpush1.msra.mxu0 0.0
        %1247 = vmatprep.subr.mxu0 0.0
        %1248 = vmatpush1.msra.mxu0 0.0
        %1249 = vmatprep.subr.mxu0 0.0
        %1250 = vmatpush1.msra.mxu0 0.0
        %1251 = vmatprep.subr.mxu0 0.0
        %1252 = vmatpush1.msra.mxu0 0.0
        %1253 = vmatprep.subr.mxu0 0.0
        %1254 = vmatpush1.msra.mxu0 0.0
        %1255 = vmatprep.subr.mxu0 0.0
        %1256 = vmatpush1.msra.mxu0 0.0
        %1257 = vmatprep.subr.mxu0 0.0
        %1258 = vmatpush1.msra.mxu0 0.0
        %1259 = vmatprep.mubr.f32.mxu0 0.0
        %1260 = vmatmul.mubr.f32.gmra.mrb[0].mxu0 %v1162
        %v1261 = vpop.f32.mrb[0].mxu0
        %v1262 = vadd.f32 0.0, %v1261
        %v1263 = vpop.f32.mrb[0].mxu0
        %1264 = vmatprep.mubr.f32.mxu0 0.0
        %1265 = vmatmul.mubr.f32.gmra.mrb[0].mxu0 %v1163
        %v1266 = vpop.f32.mrb[0].mxu0
        %v1267 = vadd.f32 0.0, %v1266
        %v1268 = vpop.f32.mrb[0].mxu0
        %1269 = vmatprep.mubr.f32.mxu0 0.0
        %1270 = vmatmul.mubr.f32.gmra.mrb[0].mxu0 %v1164
        %v1271 = vpop.f32.mrb[0].mxu0
        %v1272 = vadd.f32 0.0, %v1271
        %v1273 = vpop.f32.mrb[0].mxu0
        %1274 = vmatprep.mubr.f32.mxu0 0.0
        %1275 = vmatmul.mubr.f32.gmra.mrb[0].mxu0 %v1165
        %v1276 = vpop.f32.mrb[0].mxu0
        %v1277 = vadd.f32 0.0, %v1276
        %v1278 = vpop.f32.mrb[0].mxu0
        %1279 = vmatprep.mubr.f32.mxu0 0.0
        %1280 = vmatmul.mubr.f32.gmra.mrb[0].mxu0 %v1166
        %v1281 = vpop.f32.mrb[0].mxu0
        %v1282 = vadd.f32 0.0, %v1281
        %v1283 = vpop.f32.mrb[0].mxu0
        %1284 = vmatprep.mubr.f32.mxu0 0.0
        %1285 = vmatmul.mubr.f32.gmra.mrb[0].mxu0 %v1167
        %v1286 = vpop.f32.mrb[0].mxu0
        %v1287 = vadd.f32 0.0, %v1286
        %v1288 = vpop.f32.mrb[0].mxu0
        %1289 = vmatprep.mubr.f32.mxu0 0.0
        %1290 = vmatmul.mubr.f32.gmra.mrb[0].mxu0 %v1168
        %v1291 = vpop.f32.mrb[0].mxu0
        %v1292 = vadd.f32 0.0, %v1291
        %v1293 = vpop.f32.mrb[0].mxu0
        %1294 = vmatprep.mubr.f32.mxu0 0.0
        %1295 = vmatmul.mubr.f32.gmra.mrb[0].mxu0 %v1169
        %v1296 = vpop.f32.mrb[0].mxu0
        %v1297 = vadd.f32 0.0, %v1296
        %v1298 = vpop.f32.mrb[0].mxu0
        %1299 = vmatprep.mubr.f32.mxu0 0.0
        %1300 = vmatmul.mubr.f32.gmra.mrb[0].mxu0 %v1170
        %v1301 = vpop.f32.mrb[0].mxu0
        %v1302 = vadd.f32 0.0, %v1301
        %v1303 = vpop.f32.mrb[0].mxu0
        %1304 = vmatprep.mubr.f32.mxu0 0.0
        %1305 = vmatmul.mubr.f32.gmra.mrb[0].mxu0 %v1171
        %v1306 = vpop.f32.mrb[0].mxu0
        %v1307 = vadd.f32 0.0, %v1306
        %v1308 = vpop.f32.mrb[0].mxu0
        %1309 = vmatprep.mubr.f32.mxu0 0.0
        %1310 = vmatmul.mubr.f32.gmra.mrb[0].mxu0 %v1172
        %v1311 = vpop.f32.mrb[0].mxu0
        %v1312 = vadd.f32 0.0, %v1311
        %v1313 = vpop.f32.mrb[0].mxu0
        %1314 = vmatprep.mubr.f32.mxu0 0.0
        %1315 = vmatmul.mubr.f32.gmra.mrb[0].mxu0 %v1173
        %v1316 = vpop.f32.mrb[0].mxu0
        %v1317 = vadd.f32 0.0, %v1316
        %v1318 = vpop.f32.mrb[0].mxu0
        %1319 = vmatprep.mubr.f32.mxu0 0.0
        %1320 = vmatmul.mubr.f32.gmra.mrb[0].mxu0 %v1174
        %v1321 = vpop.f32.mrb[0].mxu0
        %v1322 = vadd.f32 0.0, %v1321
        %v1323 = vpop.f32.mrb[0].mxu0
        %1324 = vmatprep.mubr.f32.mxu0 0.0
        %1325 = vmatmul.mubr.f32.gmra.mrb[0].mxu0 %v1175
        %v1326 = vpop.f32.mrb[0].mxu0
        %v1327 = vadd.f32 0.0, %v1326
        %v1328 = vpop.f32.mrb[0].mxu0
        %1329 = vmatprep.mubr.f32.mxu0 0.0
        %1330 = vmatmul.mubr.f32.gmra.mrb[0].mxu0 %v1176
        %v1331 = vpop.f32.mrb[0].mxu0
        %v1332 = vadd.f32 0.0, %v1331
        %v1333 = vpop.f32.mrb[0].mxu0
        %1334 = vmatprep.mubr.f32.mxu0 0.0
        %1335 = vmatmul.mubr.f32.gmra.mrb[0].mxu0 %v1177
        %v1336 = vpop.f32.mrb[0].mxu0
        %v1337 = vadd.f32 0.0, %v1336
        %v1338 = vpop.f32.mrb[0].mxu0
        %1339 = vdwg.mxu0
        %v1340 = vadd.f32 %v976, %v1262
        %v1341 = vadd.f32 %v977, %v1267
        %v1342 = vadd.f32 %v978, %v1272
        %v1343 = vadd.f32 %v979, %v1277
        %v1344 = vadd.f32 %v980, %v1282
        %v1345 = vadd.f32 %v981, %v1287
        %v1346 = vadd.f32 %v982, %v1292
        %v1347 = vadd.f32 %v983, %v1297
        %v1348 = vadd.f32 %v984, %v1302
        %v1349 = vadd.f32 %v985, %v1307
        %v1350 = vadd.f32 %v986, %v1312
        %v1351 = vadd.f32 %v987, %v1317
        %v1352 = vadd.f32 %v988, %v1322
        %v1353 = vadd.f32 %v989, %v1327
        %v1354 = vadd.f32 %v990, %v1332
        %v1355 = vadd.f32 %v991, %v1337
        %s1356 = scalar_lea.vmem %s6, 1
        %v1357 = vld [vmem:[%s1356] sm:$0x1]
        %v1359 = vlaneseq
        %v1360 = vshrl.u32 %v1359, 7
        %v1361 = vsub.s32 0, %v1360
        %v1362 = vrot.slane %v1357, %v1361
        %v1364 = vadd.f32 %v1340, %v1362
        %v1365 = vadd.f32 %v1341, %v1362
        %v1366 = vadd.f32 %v1342, %v1362
        %v1367 = vadd.f32 %v1343, %v1362
        %v1368 = vadd.f32 %v1344, %v1362
        %v1369 = vadd.f32 %v1345, %v1362
        %v1370 = vadd.f32 %v1346, %v1362
        %v1371 = vadd.f32 %v1347, %v1362
        %v1372 = vadd.f32 %v1348, %v1362
        %v1373 = vadd.f32 %v1349, %v1362
        %v1374 = vadd.f32 %v1350, %v1362
        %v1375 = vadd.f32 %v1351, %v1362
        %v1376 = vadd.f32 %v1352, %v1362
        %v1377 = vadd.f32 %v1353, %v1362
        %v1378 = vadd.f32 %v1354, %v1362
        %v1379 = vadd.f32 %v1355, %v1362
        %s1380 = scalar_lea.vmem %s3, 256
        %v1381 = vld [vmem:[%s1380] sm:$0xff]
        %v1382 = vld [vmem:[%s1380 + $0x8] sm:$0xff]
        %v1383 = vld [vmem:[%s1380 + $0x10] sm:$0xff]
        %v1384 = vld [vmem:[%s1380 + $0x18] sm:$0xff]
        %v1385 = vld [vmem:[%s1380 + $0x20] sm:$0xff]
        %v1386 = vld [vmem:[%s1380 + $0x28] sm:$0xff]
        %v1387 = vld [vmem:[%s1380 + $0x30] sm:$0xff]
        %v1388 = vld [vmem:[%s1380 + $0x38] sm:$0xff]
        %v1389 = vld [vmem:[%s1380 + $0x40] sm:$0xff]
        %v1390 = vld [vmem:[%s1380 + $0x48] sm:$0xff]
        %v1391 = vld [vmem:[%s1380 + $0x50] sm:$0xff]
        %v1392 = vld [vmem:[%s1380 + $0x58] sm:$0xff]
        %v1393 = vld [vmem:[%s1380 + $0x60] sm:$0xff]
        %v1394 = vld [vmem:[%s1380 + $0x68] sm:$0xff]
        %v1395 = vld [vmem:[%s1380 + $0x70] sm:$0xff]
        %v1396 = vld [vmem:[%s1380 + $0x78] sm:$0xff]
        %s1397 = scalar_lea.vmem %s4, 2
        %v1398 = vld [vmem:[%s1397] sm:$0x1]
        %v1400 = vlaneseq
        %v1401 = vshrl.u32 %v1400, 7
        %v1402 = vsub.s32 0, %v1401
        %v1403 = vrot.slane %v1398, %v1402
        %1405 = vmatprep.subr.mxu0 0.0
        %1406 = vmatpush1.msra.mxu0 %v1381
        %1407 = vmatprep.subr.mxu0 0.0
        %1408 = vmatpush1.msra.mxu0 %v1382
        %1409 = vmatprep.subr.mxu0 0.0
        %1410 = vmatpush1.msra.mxu0 %v1383
        %1411 = vmatprep.subr.mxu0 0.0
        %1412 = vmatpush1.msra.mxu0 %v1384
        %1413 = vmatprep.subr.mxu0 0.0
        %1414 = vmatpush1.msra.mxu0 %v1385
        %1415 = vmatprep.subr.mxu0 0.0
        %1416 = vmatpush1.msra.mxu0 %v1386
        %1417 = vmatprep.subr.mxu0 0.0
        %1418 = vmatpush1.msra.mxu0 %v1387
        %1419 = vmatprep.subr.mxu0 0.0
        %1420 = vmatpush1.msra.mxu0 %v1388
        %1421 = vmatprep.subr.mxu0 0.0
        %1422 = vmatpush1.msra.mxu0 %v1389
        %1423 = vmatprep.subr.mxu0 0.0
        %1424 = vmatpush1.msra.mxu0 %v1390
        %1425 = vmatprep.subr.mxu0 0.0
        %1426 = vmatpush1.msra.mxu0 %v1391
        %1427 = vmatprep.subr.mxu0 0.0
        %1428 = vmatpush1.msra.mxu0 %v1392
        %1429 = vmatprep.subr.mxu0 0.0
        %1430 = vmatpush1.msra.mxu0 %v1393
        %1431 = vmatprep.subr.mxu0 0.0
        %1432 = vmatpush1.msra.mxu0 %v1394
        %1433 = vmatprep.subr.mxu0 0.0
        %1434 = vmatpush1.msra.mxu0 %v1395
        %1435 = vmatprep.subr.mxu0 0.0
        %1436 = vmatpush1.msra.mxu0 %v1396
        %1437 = vmatprep.subr.mxu0 0.0
        %1438 = vmatpush1.msra.mxu0 0.0
        %1439 = vmatprep.subr.mxu0 0.0
        %1440 = vmatpush1.msra.mxu0 0.0
        %1441 = vmatprep.subr.mxu0 0.0
        %1442 = vmatpush1.msra.mxu0 0.0
        %1443 = vmatprep.subr.mxu0 0.0
        %1444 = vmatpush1.msra.mxu0 0.0
        %1445 = vmatprep.subr.mxu0 0.0
        %1446 = vmatpush1.msra.mxu0 0.0
        %1447 = vmatprep.subr.mxu0 0.0
        %1448 = vmatpush1.msra.mxu0 0.0
        %1449 = vmatprep.subr.mxu0 0.0
        %1450 = vmatpush1.msra.mxu0 0.0
        %1451 = vmatprep.subr.mxu0 0.0
        %1452 = vmatpush1.msra.mxu0 0.0
        %1453 = vmatprep.subr.mxu0 0.0
        %1454 = vmatpush1.msra.mxu0 0.0
        %1455 = vmatprep.subr.mxu0 0.0
        %1456 = vmatpush1.msra.mxu0 0.0
        %1457 = vmatprep.subr.mxu0 0.0
        %1458 = vmatpush1.msra.mxu0 0.0
        %1459 = vmatprep.subr.mxu0 0.0
        %1460 = vmatpush1.msra.mxu0 0.0
        %1461 = vmatprep.subr.mxu0 0.0
        %1462 = vmatpush1.msra.mxu0 0.0
        %1463 = vmatprep.subr.mxu0 0.0
        %1464 = vmatpush1.msra.mxu0 0.0
        %1465 = vmatprep.subr.mxu0 0.0
        %1466 = vmatpush1.msra.mxu0 0.0
        %1467 = vmatprep.subr.mxu0 0.0
        %1468 = vmatpush1.msra.mxu0 0.0
        %1469 = vmatprep.mubr.f32.mxu0 0.0
        %1470 = vmatmul.mubr.f32.gmra.mrb[0].mxu0 %v1364
        %v1471 = vpop.f32.mrb[0].mxu0
        %v1472 = vadd.f32 %v1403, %v1471
        %v1473 = vpop.f32.mrb[0].mxu0
        %1474 = vmatprep.mubr.f32.mxu0 0.0
        %1475 = vmatmul.mubr.f32.gmra.mrb[0].mxu0 %v1365
        %v1476 = vpop.f32.mrb[0].mxu0
        %v1477 = vadd.f32 %v1403, %v1476
        %v1478 = vpop.f32.mrb[0].mxu0
        %1479 = vmatprep.mubr.f32.mxu0 0.0
        %1480 = vmatmul.mubr.f32.gmra.mrb[0].mxu0 %v1366
        %v1481 = vpop.f32.mrb[0].mxu0
        %v1482 = vadd.f32 %v1403, %v1481
        %v1483 = vpop.f32.mrb[0].mxu0
        %1484 = vmatprep.mubr.f32.mxu0 0.0
        %1485 = vmatmul.mubr.f32.gmra.mrb[0].mxu0 %v1367
        %v1486 = vpop.f32.mrb[0].mxu0
        %v1487 = vadd.f32 %v1403, %v1486
        %v1488 = vpop.f32.mrb[0].mxu0
        %1489 = vmatprep.mubr.f32.mxu0 0.0
        %1490 = vmatmul.mubr.f32.gmra.mrb[0].mxu0 %v1368
        %v1491 = vpop.f32.mrb[0].mxu0
        %v1492 = vadd.f32 %v1403, %v1491
        %v1493 = vpop.f32.mrb[0].mxu0
        %1494 = vmatprep.mubr.f32.mxu0 0.0
        %1495 = vmatmul.mubr.f32.gmra.mrb[0].mxu0 %v1369
        %v1496 = vpop.f32.mrb[0].mxu0
        %v1497 = vadd.f32 %v1403, %v1496
        %v1498 = vpop.f32.mrb[0].mxu0
        %1499 = vmatprep.mubr.f32.mxu0 0.0
        %1500 = vmatmul.mubr.f32.gmra.mrb[0].mxu0 %v1370
        %v1501 = vpop.f32.mrb[0].mxu0
        %v1502 = vadd.f32 %v1403, %v1501
        %v1503 = vpop.f32.mrb[0].mxu0
        %1504 = vmatprep.mubr.f32.mxu0 0.0
        %1505 = vmatmul.mubr.f32.gmra.mrb[0].mxu0 %v1371
        %v1506 = vpop.f32.mrb[0].mxu0
        %v1507 = vadd.f32 %v1403, %v1506
        %v1508 = vpop.f32.mrb[0].mxu0
        %1509 = vmatprep.mubr.f32.mxu0 0.0
        %1510 = vmatmul.mubr.f32.gmra.mrb[0].mxu0 %v1372
        %v1511 = vpop.f32.mrb[0].mxu0
        %v1512 = vadd.f32 %v1403, %v1511
        %v1513 = vpop.f32.mrb[0].mxu0
        %1514 = vmatprep.mubr.f32.mxu0 0.0
        %1515 = vmatmul.mubr.f32.gmra.mrb[0].mxu0 %v1373
        %v1516 = vpop.f32.mrb[0].mxu0
        %v1517 = vadd.f32 %v1403, %v1516
        %v1518 = vpop.f32.mrb[0].mxu0
        %1519 = vmatprep.mubr.f32.mxu0 0.0
        %1520 = vmatmul.mubr.f32.gmra.mrb[0].mxu0 %v1374
        %v1521 = vpop.f32.mrb[0].mxu0
        %v1522 = vadd.f32 %v1403, %v1521
        %v1523 = vpop.f32.mrb[0].mxu0
        %1524 = vmatprep.mubr.f32.mxu0 0.0
        %1525 = vmatmul.mubr.f32.gmra.mrb[0].mxu0 %v1375
        %v1526 = vpop.f32.mrb[0].mxu0
        %v1527 = vadd.f32 %v1403, %v1526
        %v1528 = vpop.f32.mrb[0].mxu0
        %1529 = vmatprep.mubr.f32.mxu0 0.0
        %1530 = vmatmul.mubr.f32.gmra.mrb[0].mxu0 %v1376
        %v1531 = vpop.f32.mrb[0].mxu0
        %v1532 = vadd.f32 %v1403, %v1531
        %v1533 = vpop.f32.mrb[0].mxu0
        %1534 = vmatprep.mubr.f32.mxu0 0.0
        %1535 = vmatmul.mubr.f32.gmra.mrb[0].mxu0 %v1377
        %v1536 = vpop.f32.mrb[0].mxu0
        %v1537 = vadd.f32 %v1403, %v1536
        %v1538 = vpop.f32.mrb[0].mxu0
        %1539 = vmatprep.mubr.f32.mxu0 0.0
        %1540 = vmatmul.mubr.f32.gmra.mrb[0].mxu0 %v1378
        %v1541 = vpop.f32.mrb[0].mxu0
        %v1542 = vadd.f32 %v1403, %v1541
        %v1543 = vpop.f32.mrb[0].mxu0
        %1544 = vmatprep.mubr.f32.mxu0 0.0
        %1545 = vmatmul.mubr.f32.gmra.mrb[0].mxu0 %v1379
        %v1546 = vpop.f32.mrb[0].mxu0
        %v1547 = vadd.f32 %v1403, %v1546
        %v1548 = vpop.f32.mrb[0].mxu0
        %1549 = vdwg.mxu0
        %v1550 = vtanh.pop %v1472
        %v1551 = vtanh.pop %v1477
        %v1552 = vtanh.pop %v1482
        %v1553 = vtanh.pop %v1487
        %v1554 = vtanh.pop %v1492
        %v1555 = vtanh.pop %v1497
        %v1556 = vtanh.pop %v1502
        %v1557 = vtanh.pop %v1507
        %v1558 = vtanh.pop %v1512
        %v1559 = vtanh.pop %v1517
        %v1560 = vtanh.pop %v1522
        %v1561 = vtanh.pop %v1527
        %v1562 = vtanh.pop %v1532
        %v1563 = vtanh.pop %v1537
        %v1564 = vtanh.pop %v1542
        %v1565 = vtanh.pop %v1547
        %s1566 = scalar_lea.vmem [#allocation2], 256
        %v1567 = vld [vmem:[%s1566] sm:$0xff]
        %v1568 = vld [vmem:[%s1566 + $0x8] sm:$0xff]
        %v1569 = vld [vmem:[%s1566 + $0x10] sm:$0xff]
        %v1570 = vld [vmem:[%s1566 + $0x18] sm:$0xff]
        %v1571 = vld [vmem:[%s1566 + $0x20] sm:$0xff]
        %v1572 = vld [vmem:[%s1566 + $0x28] sm:$0xff]
        %v1573 = vld [vmem:[%s1566 + $0x30] sm:$0xff]
        %v1574 = vld [vmem:[%s1566 + $0x38] sm:$0xff]
        %v1575 = vld [vmem:[%s1566 + $0x40] sm:$0xff]
        %v1576 = vld [vmem:[%s1566 + $0x48] sm:$0xff]
        %v1577 = vld [vmem:[%s1566 + $0x50] sm:$0xff]
        %v1578 = vld [vmem:[%s1566 + $0x58] sm:$0xff]
        %v1579 = vld [vmem:[%s1566 + $0x60] sm:$0xff]
        %v1580 = vld [vmem:[%s1566 + $0x68] sm:$0xff]
        %v1581 = vld [vmem:[%s1566 + $0x70] sm:$0xff]
        %v1582 = vld [vmem:[%s1566 + $0x78] sm:$0xff]
        %1583 = vmatprep.subr.mxu0 0.0
        %1584 = vmatpush1.msra.mxu0 %v1567
        %1585 = vmatprep.subr.mxu0 0.0
        %1586 = vmatpush1.msra.mxu0 %v1568
        %1587 = vmatprep.subr.mxu0 0.0
        %1588 = vmatpush1.msra.mxu0 %v1569
        %1589 = vmatprep.subr.mxu0 0.0
        %1590 = vmatpush1.msra.mxu0 %v1570
        %1591 = vmatprep.subr.mxu0 0.0
        %1592 = vmatpush1.msra.mxu0 %v1571
        %1593 = vmatprep.subr.mxu0 0.0
        %1594 = vmatpush1.msra.mxu0 %v1572
        %1595 = vmatprep.subr.mxu0 0.0
        %1596 = vmatpush1.msra.mxu0 %v1573
        %1597 = vmatprep.subr.mxu0 0.0
        %1598 = vmatpush1.msra.mxu0 %v1574
        %1599 = vmatprep.subr.mxu0 0.0
        %1600 = vmatpush1.msra.mxu0 %v1575
        %1601 = vmatprep.subr.mxu0 0.0
        %1602 = vmatpush1.msra.mxu0 %v1576
        %1603 = vmatprep.subr.mxu0 0.0
        %1604 = vmatpush1.msra.mxu0 %v1577
        %1605 = vmatprep.subr.mxu0 0.0
        %1606 = vmatpush1.msra.mxu0 %v1578
        %1607 = vmatprep.subr.mxu0 0.0
        %1608 = vmatpush1.msra.mxu0 %v1579
        %1609 = vmatprep.subr.mxu0 0.0
        %1610 = vmatpush1.msra.mxu0 %v1580
        %1611 = vmatprep.subr.mxu0 0.0
        %1612 = vmatpush1.msra.mxu0 %v1581
        %1613 = vmatprep.subr.mxu0 0.0
        %1614 = vmatpush1.msra.mxu0 %v1582
        %1615 = vmatprep.subr.mxu0 0.0
        %1616 = vmatpush1.msra.mxu0 0.0
        %1617 = vmatprep.subr.mxu0 0.0
        %1618 = vmatpush1.msra.mxu0 0.0
        %1619 = vmatprep.subr.mxu0 0.0
        %1620 = vmatpush1.msra.mxu0 0.0
        %1621 = vmatprep.subr.mxu0 0.0
        %1622 = vmatpush1.msra.mxu0 0.0
        %1623 = vmatprep.subr.mxu0 0.0
        %1624 = vmatpush1.msra.mxu0 0.0
        %1625 = vmatprep.subr.mxu0 0.0
        %1626 = vmatpush1.msra.mxu0 0.0
        %1627 = vmatprep.subr.mxu0 0.0
        %1628 = vmatpush1.msra.mxu0 0.0
        %1629 = vmatprep.subr.mxu0 0.0
        %1630 = vmatpush1.msra.mxu0 0.0
        %1631 = vmatprep.subr.mxu0 0.0
        %1632 = vmatpush1.msra.mxu0 0.0
        %1633 = vmatprep.subr.mxu0 0.0
        %1634 = vmatpush1.msra.mxu0 0.0
        %1635 = vmatprep.subr.mxu0 0.0
        %1636 = vmatpush1.msra.mxu0 0.0
        %1637 = vmatprep.subr.mxu0 0.0
        %1638 = vmatpush1.msra.mxu0 0.0
        %1639 = vmatprep.subr.mxu0 0.0
        %1640 = vmatpush1.msra.mxu0 0.0
        %1641 = vmatprep.subr.mxu0 0.0
        %1642 = vmatpush1.msra.mxu0 0.0
        %1643 = vmatprep.subr.mxu0 0.0
        %1644 = vmatpush1.msra.mxu0 0.0
        %1645 = vmatprep.subr.mxu0 0.0
        %1646 = vmatpush1.msra.mxu0 0.0
        %1647 = vmatprep.mubr.f32.mxu0 0.0
        %1648 = vmatmul.mubr.f32.gmra.mrb[0].mxu0 %v1550
        %v1649 = vpop.f32.mrb[0].mxu0
        %v1650 = vadd.f32 0.0, %v1649
        %v1651 = vpop.f32.mrb[0].mxu0
        %1652 = vmatprep.mubr.f32.mxu0 0.0
        %1653 = vmatmul.mubr.f32.gmra.mrb[0].mxu0 %v1551
        %v1654 = vpop.f32.mrb[0].mxu0
        %v1655 = vadd.f32 0.0, %v1654
        %v1656 = vpop.f32.mrb[0].mxu0
        %1657 = vmatprep.mubr.f32.mxu0 0.0
        %1658 = vmatmul.mubr.f32.gmra.mrb[0].mxu0 %v1552
        %v1659 = vpop.f32.mrb[0].mxu0
        %v1660 = vadd.f32 0.0, %v1659
        %v1661 = vpop.f32.mrb[0].mxu0
        %1662 = vmatprep.mubr.f32.mxu0 0.0
        %1663 = vmatmul.mubr.f32.gmra.mrb[0].mxu0 %v1553
        %v1664 = vpop.f32.mrb[0].mxu0
        %v1665 = vadd.f32 0.0, %v1664
        %v1666 = vpop.f32.mrb[0].mxu0
        %1667 = vmatprep.mubr.f32.mxu0 0.0
        %1668 = vmatmul.mubr.f32.gmra.mrb[0].mxu0 %v1554
        %v1669 = vpop.f32.mrb[0].mxu0
        %v1670 = vadd.f32 0.0, %v1669
        %v1671 = vpop.f32.mrb[0].mxu0
        %1672 = vmatprep.mubr.f32.mxu0 0.0
        %1673 = vmatmul.mubr.f32.gmra.mrb[0].mxu0 %v1555
        %v1674 = vpop.f32.mrb[0].mxu0
        %v1675 = vadd.f32 0.0, %v1674
        %v1676 = vpop.f32.mrb[0].mxu0
        %1677 = vmatprep.mubr.f32.mxu0 0.0
        %1678 = vmatmul.mubr.f32.gmra.mrb[0].mxu0 %v1556
        %v1679 = vpop.f32.mrb[0].mxu0
        %v1680 = vadd.f32 0.0, %v1679
        %v1681 = vpop.f32.mrb[0].mxu0
        %1682 = vmatprep.mubr.f32.mxu0 0.0
        %1683 = vmatmul.mubr.f32.gmra.mrb[0].mxu0 %v1557
        %v1684 = vpop.f32.mrb[0].mxu0
        %v1685 = vadd.f32 0.0, %v1684
        %v1686 = vpop.f32.mrb[0].mxu0
        %1687 = vmatprep.mubr.f32.mxu0 0.0
        %1688 = vmatmul.mubr.f32.gmra.mrb[0].mxu0 %v1558
        %v1689 = vpop.f32.mrb[0].mxu0
        %v1690 = vadd.f32 0.0, %v1689
        %v1691 = vpop.f32.mrb[0].mxu0
        %1692 = vmatprep.mubr.f32.mxu0 0.0
        %1693 = vmatmul.mubr.f32.gmra.mrb[0].mxu0 %v1559
        %v1694 = vpop.f32.mrb[0].mxu0
        %v1695 = vadd.f32 0.0, %v1694
        %v1696 = vpop.f32.mrb[0].mxu0
        %1697 = vmatprep.mubr.f32.mxu0 0.0
        %1698 = vmatmul.mubr.f32.gmra.mrb[0].mxu0 %v1560
        %v1699 = vpop.f32.mrb[0].mxu0
        %v1700 = vadd.f32 0.0, %v1699
        %v1701 = vpop.f32.mrb[0].mxu0
        %1702 = vmatprep.mubr.f32.mxu0 0.0
        %1703 = vmatmul.mubr.f32.gmra.mrb[0].mxu0 %v1561
        %v1704 = vpop.f32.mrb[0].mxu0
        %v1705 = vadd.f32 0.0, %v1704
        %v1706 = vpop.f32.mrb[0].mxu0
        %1707 = vmatprep.mubr.f32.mxu0 0.0
        %1708 = vmatmul.mubr.f32.gmra.mrb[0].mxu0 %v1562
        %v1709 = vpop.f32.mrb[0].mxu0
        %v1710 = vadd.f32 0.0, %v1709
        %v1711 = vpop.f32.mrb[0].mxu0
        %1712 = vmatprep.mubr.f32.mxu0 0.0
        %1713 = vmatmul.mubr.f32.gmra.mrb[0].mxu0 %v1563
        %v1714 = vpop.f32.mrb[0].mxu0
        %v1715 = vadd.f32 0.0, %v1714
        %v1716 = vpop.f32.mrb[0].mxu0
        %1717 = vmatprep.mubr.f32.mxu0 0.0
        %1718 = vmatmul.mubr.f32.gmra.mrb[0].mxu0 %v1564
        %v1719 = vpop.f32.mrb[0].mxu0
        %v1720 = vadd.f32 0.0, %v1719
        %v1721 = vpop.f32.mrb[0].mxu0
        %1722 = vmatprep.mubr.f32.mxu0 0.0
        %1723 = vmatmul.mubr.f32.gmra.mrb[0].mxu0 %v1565
        %v1724 = vpop.f32.mrb[0].mxu0
        %v1725 = vadd.f32 0.0, %v1724
        %v1726 = vpop.f32.mrb[0].mxu0
        %1727 = vdwg.mxu0
        %v1728 = vadd.f32 %v1364, %v1650
        %v1729 = vadd.f32 %v1365, %v1655
        %v1730 = vadd.f32 %v1366, %v1660
        %v1731 = vadd.f32 %v1367, %v1665
        %v1732 = vadd.f32 %v1368, %v1670
        %v1733 = vadd.f32 %v1369, %v1675
        %v1734 = vadd.f32 %v1370, %v1680
        %v1735 = vadd.f32 %v1371, %v1685
        %v1736 = vadd.f32 %v1372, %v1690
        %v1737 = vadd.f32 %v1373, %v1695
        %v1738 = vadd.f32 %v1374, %v1700
        %v1739 = vadd.f32 %v1375, %v1705
        %v1740 = vadd.f32 %v1376, %v1710
        %v1741 = vadd.f32 %v1377, %v1715
        %v1742 = vadd.f32 %v1378, %v1720
        %v1743 = vadd.f32 %v1379, %v1725
        %s1744 = scalar_lea.vmem %s6, 2
        %v1745 = vld [vmem:[%s1744] sm:$0x1]
        %v1747 = vlaneseq
        %v1748 = vshrl.u32 %v1747, 7
        %v1749 = vsub.s32 0, %v1748
        %v1750 = vrot.slane %v1745, %v1749
        %v1752 = vadd.f32 %v1728, %v1750
        %v1753 = vadd.f32 %v1729, %v1750
        %v1754 = vadd.f32 %v1730, %v1750
        %v1755 = vadd.f32 %v1731, %v1750
        %v1756 = vadd.f32 %v1732, %v1750
        %v1757 = vadd.f32 %v1733, %v1750
        %v1758 = vadd.f32 %v1734, %v1750
        %v1759 = vadd.f32 %v1735, %v1750
        %v1760 = vadd.f32 %v1736, %v1750
        %v1761 = vadd.f32 %v1737, %v1750
        %v1762 = vadd.f32 %v1738, %v1750
        %v1763 = vadd.f32 %v1739, %v1750
        %v1764 = vadd.f32 %v1740, %v1750
        %v1765 = vadd.f32 %v1741, %v1750
        %v1766 = vadd.f32 %v1742, %v1750
        %v1767 = vadd.f32 %v1743, %v1750
        %v1768 = vld [vmem:[%s7] sm:$0xff]
        %v1769 = vld [vmem:[%s7 + $0x8] sm:$0xff]
        %v1770 = vld [vmem:[%s7 + $0x10] sm:$0xff]
        %v1771 = vld [vmem:[%s7 + $0x18] sm:$0xff]
        %v1772 = vld [vmem:[%s7 + $0x20] sm:$0xff]
        %v1773 = vld [vmem:[%s7 + $0x28] sm:$0xff]
        %v1774 = vld [vmem:[%s7 + $0x30] sm:$0xff]
        %v1775 = vld [vmem:[%s7 + $0x38] sm:$0xff]
        %v1776 = vld [vmem:[%s7 + $0x40] sm:$0xff]
        %v1777 = vld [vmem:[%s7 + $0x48] sm:$0xff]
        %v1778 = vld [vmem:[%s7 + $0x50] sm:$0xff]
        %v1779 = vld [vmem:[%s7 + $0x58] sm:$0xff]
        %v1780 = vld [vmem:[%s7 + $0x60] sm:$0xff]
        %v1781 = vld [vmem:[%s7 + $0x68] sm:$0xff]
        %v1782 = vld [vmem:[%s7 + $0x70] sm:$0xff]
        %v1783 = vld [vmem:[%s7 + $0x78] sm:$0xff]
        %v1784 = vld [vmem:[%s8] sm:$0x1]
        %v1786 = vlaneseq
        %v1787 = vshrl.u32 %v1786, 7
        %v1788 = vsub.s32 0, %v1787
        %v1789 = vrot.slane %v1784, %v1788
        %1791 = vmatprep.subr.mxu0 0.0
        %1792 = vmatpush1.msra.mxu0 %v1768
        %1793 = vmatprep.subr.mxu0 0.0
        %1794 = vmatpush1.msra.mxu0 %v1769
        %1795 = vmatprep.subr.mxu0 0.0
        %1796 = vmatpush1.msra.mxu0 %v1770
        %1797 = vmatprep.subr.mxu0 0.0
        %1798 = vmatpush1.msra.mxu0 %v1771
        %1799 = vmatprep.subr.mxu0 0.0
        %1800 = vmatpush1.msra.mxu0 %v1772
        %1801 = vmatprep.subr.mxu0 0.0
        %1802 = vmatpush1.msra.mxu0 %v1773
        %1803 = vmatprep.subr.mxu0 0.0
        %1804 = vmatpush1.msra.mxu0 %v1774
        %1805 = vmatprep.subr.mxu0 0.0
        %1806 = vmatpush1.msra.mxu0 %v1775
        %1807 = vmatprep.subr.mxu0 0.0
        %1808 = vmatpush1.msra.mxu0 %v1776
        %1809 = vmatprep.subr.mxu0 0.0
        %1810 = vmatpush1.msra.mxu0 %v1777
        %1811 = vmatprep.subr.mxu0 0.0
        %1812 = vmatpush1.msra.mxu0 %v1778
        %1813 = vmatprep.subr.mxu0 0.0
        %1814 = vmatpush1.msra.mxu0 %v1779
        %1815 = vmatprep.subr.mxu0 0.0
        %1816 = vmatpush1.msra.mxu0 %v1780
        %1817 = vmatprep.subr.mxu0 0.0
        %1818 = vmatpush1.msra.mxu0 %v1781
        %1819 = vmatprep.subr.mxu0 0.0
        %1820 = vmatpush1.msra.mxu0 %v1782
        %1821 = vmatprep.subr.mxu0 0.0
        %1822 = vmatpush1.msra.mxu0 %v1783
        %1823 = vmatprep.subr.mxu0 0.0
        %1824 = vmatpush1.msra.mxu0 0.0
        %1825 = vmatprep.subr.mxu0 0.0
        %1826 = vmatpush1.msra.mxu0 0.0
        %1827 = vmatprep.subr.mxu0 0.0
        %1828 = vmatpush1.msra.mxu0 0.0
        %1829 = vmatprep.subr.mxu0 0.0
        %1830 = vmatpush1.msra.mxu0 0.0
        %1831 = vmatprep.subr.mxu0 0.0
        %1832 = vmatpush1.msra.mxu0 0.0
        %1833 = vmatprep.subr.mxu0 0.0
        %1834 = vmatpush1.msra.mxu0 0.0
        %1835 = vmatprep.subr.mxu0 0.0
        %1836 = vmatpush1.msra.mxu0 0.0
        %1837 = vmatprep.subr.mxu0 0.0
        %1838 = vmatpush1.msra.mxu0 0.0
        %1839 = vmatprep.subr.mxu0 0.0
        %1840 = vmatpush1.msra.mxu0 0.0
        %1841 = vmatprep.subr.mxu0 0.0
        %1842 = vmatpush1.msra.mxu0 0.0
        %1843 = vmatprep.subr.mxu0 0.0
        %1844 = vmatpush1.msra.mxu0 0.0
        %1845 = vmatprep.subr.mxu0 0.0
        %1846 = vmatpush1.msra.mxu0 0.0
        %1847 = vmatprep.subr.mxu0 0.0
        %1848 = vmatpush1.msra.mxu0 0.0
        %1849 = vmatprep.subr.mxu0 0.0
        %1850 = vmatpush1.msra.mxu0 0.0
        %1851 = vmatprep.subr.mxu0 0.0
        %1852 = vmatpush1.msra.mxu0 0.0
        %1853 = vmatprep.subr.mxu0 0.0
        %1854 = vmatpush1.msra.mxu0 0.0
        %1855 = vmatprep.mubr.f32.mxu0 0.0
        %1856 = vmatmul.mubr.f32.gmra.mrb[0].mxu0 %v1752
        %v1857 = vpop.f32.mrb[0].mxu0
        %v1858 = vadd.f32 %v1789, %v1857
        %v1859 = vpop.f32.mrb[0].mxu0
        %1860 = vmatprep.mubr.f32.mxu0 0.0
        %1861 = vmatmul.mubr.f32.gmra.mrb[0].mxu0 %v1753
        %v1862 = vpop.f32.mrb[0].mxu0
        %v1863 = vadd.f32 %v1789, %v1862
        %v1864 = vpop.f32.mrb[0].mxu0
        %1865 = vmatprep.mubr.f32.mxu0 0.0
        %1866 = vmatmul.mubr.f32.gmra.mrb[0].mxu0 %v1754
        %v1867 = vpop.f32.mrb[0].mxu0
        %v1868 = vadd.f32 %v1789, %v1867
        %v1869 = vpop.f32.mrb[0].mxu0
        %1870 = vmatprep.mubr.f32.mxu0 0.0
        %1871 = vmatmul.mubr.f32.gmra.mrb[0].mxu0 %v1755
        %v1872 = vpop.f32.mrb[0].mxu0
        %v1873 = vadd.f32 %v1789, %v1872
        %v1874 = vpop.f32.mrb[0].mxu0
        %1875 = vmatprep.mubr.f32.mxu0 0.0
        %1876 = vmatmul.mubr.f32.gmra.mrb[0].mxu0 %v1756
        %v1877 = vpop.f32.mrb[0].mxu0
        %v1878 = vadd.f32 %v1789, %v1877
        %v1879 = vpop.f32.mrb[0].mxu0
        %1880 = vmatprep.mubr.f32.mxu0 0.0
        %1881 = vmatmul.mubr.f32.gmra.mrb[0].mxu0 %v1757
        %v1882 = vpop.f32.mrb[0].mxu0
        %v1883 = vadd.f32 %v1789, %v1882
        %v1884 = vpop.f32.mrb[0].mxu0
        %1885 = vmatprep.mubr.f32.mxu0 0.0
        %1886 = vmatmul.mubr.f32.gmra.mrb[0].mxu0 %v1758
        %v1887 = vpop.f32.mrb[0].mxu0
        %v1888 = vadd.f32 %v1789, %v1887
        %v1889 = vpop.f32.mrb[0].mxu0
        %1890 = vmatprep.mubr.f32.mxu0 0.0
        %1891 = vmatmul.mubr.f32.gmra.mrb[0].mxu0 %v1759
        %v1892 = vpop.f32.mrb[0].mxu0
        %v1893 = vadd.f32 %v1789, %v1892
        %v1894 = vpop.f32.mrb[0].mxu0
        %1895 = vmatprep.mubr.f32.mxu0 0.0
        %1896 = vmatmul.mubr.f32.gmra.mrb[0].mxu0 %v1760
        %v1897 = vpop.f32.mrb[0].mxu0
        %v1898 = vadd.f32 %v1789, %v1897
        %v1899 = vpop.f32.mrb[0].mxu0
        %1900 = vmatprep.mubr.f32.mxu0 0.0
        %1901 = vmatmul.mubr.f32.gmra.mrb[0].mxu0 %v1761
        %v1902 = vpop.f32.mrb[0].mxu0
        %v1903 = vadd.f32 %v1789, %v1902
        %v1904 = vpop.f32.mrb[0].mxu0
        %1905 = vmatprep.mubr.f32.mxu0 0.0
        %1906 = vmatmul.mubr.f32.gmra.mrb[0].mxu0 %v1762
        %v1907 = vpop.f32.mrb[0].mxu0
        %v1908 = vadd.f32 %v1789, %v1907
        %v1909 = vpop.f32.mrb[0].mxu0
        %1910 = vmatprep.mubr.f32.mxu0 0.0
        %1911 = vmatmul.mubr.f32.gmra.mrb[0].mxu0 %v1763
        %v1912 = vpop.f32.mrb[0].mxu0
        %v1913 = vadd.f32 %v1789, %v1912
        %v1914 = vpop.f32.mrb[0].mxu0
        %1915 = vmatprep.mubr.f32.mxu0 0.0
        %1916 = vmatmul.mubr.f32.gmra.mrb[0].mxu0 %v1764
        %v1917 = vpop.f32.mrb[0].mxu0
        %v1918 = vadd.f32 %v1789, %v1917
        %v1919 = vpop.f32.mrb[0].mxu0
        %1920 = vmatprep.mubr.f32.mxu0 0.0
        %1921 = vmatmul.mubr.f32.gmra.mrb[0].mxu0 %v1765
        %v1922 = vpop.f32.mrb[0].mxu0
        %v1923 = vadd.f32 %v1789, %v1922
        %v1924 = vpop.f32.mrb[0].mxu0
        %1925 = vmatprep.mubr.f32.mxu0 0.0
        %1926 = vmatmul.mubr.f32.gmra.mrb[0].mxu0 %v1766
        %v1927 = vpop.f32.mrb[0].mxu0
        %v1928 = vadd.f32 %v1789, %v1927
        %v1929 = vpop.f32.mrb[0].mxu0
        %1930 = vmatprep.mubr.f32.mxu0 0.0
        %1931 = vmatmul.mubr.f32.gmra.mrb[0].mxu0 %v1767
        %v1932 = vpop.f32.mrb[0].mxu0
        %v1933 = vadd.f32 %v1789, %v1932
        %v1934 = vpop.f32.mrb[0].mxu0
        %1935 = vdwg.mxu0
        %vm1936 = vcmask 31744
        %1937 = vst.msk [vmem:[%s349] sm:$0xff] %vm1936, %v1858
        %1938 = vst.msk [vmem:[%s349 + $0x8] sm:$0xff] %vm1936, %v1863
        %1939 = vst.msk [vmem:[%s349 + $0x10] sm:$0xff] %vm1936, %v1868
        %1940 = vst.msk [vmem:[%s349 + $0x18] sm:$0xff] %vm1936, %v1873
        %1941 = vst.msk [vmem:[%s349 + $0x20] sm:$0xff] %vm1936, %v1878
        %1942 = vst.msk [vmem:[%s349 + $0x28] sm:$0xff] %vm1936, %v1883
        %1943 = vst.msk [vmem:[%s349 + $0x30] sm:$0xff] %vm1936, %v1888
        %1944 = vst.msk [vmem:[%s349 + $0x38] sm:$0xff] %vm1936, %v1893
        %1945 = vst.msk [vmem:[%s349 + $0x40] sm:$0xff] %vm1936, %v1898
        %1946 = vst.msk [vmem:[%s349 + $0x48] sm:$0xff] %vm1936, %v1903
        %1947 = vst.msk [vmem:[%s349 + $0x50] sm:$0xff] %vm1936, %v1908
        %1948 = vst.msk [vmem:[%s349 + $0x58] sm:$0xff] %vm1936, %v1913
        %1949 = vst.msk [vmem:[%s349 + $0x60] sm:$0xff] %vm1936, %v1918
        %1950 = vst.msk [vmem:[%s349 + $0x68] sm:$0xff] %vm1936, %v1923
        %1951 = vst.msk [vmem:[%s349 + $0x70] sm:$0xff] %vm1936, %v1928
        %1952 = vst.msk [vmem:[%s349 + $0x78] sm:$0xff] %vm1936, %v1933
        %s1953 = smul.u32 16, %s21
        %p1954 = scmp.lt.s32.totalorder %s1953, 31
        %s1955 = scalar_select %p1954, %s1953, 31
        %s1956 = smul.addr %s1955, 8
        %s1957 = scalar_lea.vmem %s9, %s1956
        // Predicated region
        $region61: #{tpu_custom_call.1} parent=55 // pred_check
          %p1958 = pneg %p233
        $region62: #{tpu_custom_call.1} parent=55 // pred_check_branch
          %1960 = sbr.rel (%p1958) target = $region64
        $region63: #{tpu_custom_call.1} parent=55 // pred_region
          %s1961 = smul.u32 16, %s21
        $region64: #{tpu_custom_call.1} parent=55 // pred_fallthru
          _
      $region56: #{tpu_custom_call.1} parent=5 // pred_fallthru
        _
      %p1962 = scmp.le.s32.totalorder 2, %s16
      // Predicated region
      $region65: #{tpu_custom_call.1} parent=5 // pred_check
        %p1963 = pneg %p1962
      $region66: #{tpu_custom_call.1} parent=5 // pred_check_branch
        %1965 = sbr.rel (%p1963) target = $region68
      $region67: #{tpu_custom_call.1} parent=5 // pred_region
        %s1966 = ssub.s32 %s16, 2
        // Predicated region
        $region69: #{tpu_custom_call.1} parent=67 // pred_check
          %p1967 = pneg %p239
        $region70: #{tpu_custom_call.1} parent=67 // pred_check_branch
          %1969 = sbr.rel (%p1967) target = $region72
        $region71: #{tpu_custom_call.1} parent=67 // pred_region
          %s1970 = smul.u32 16, %s22
          %p1971 = scmp.lt.s32.totalorder %s1970, 31
          %s1972 = scalar_select %p1971, %s1970, 31
          %s1973 = smul.addr %s1972, 8
          %s1974 = scalar_lea.vmem %s9, %s1973
        $region72: #{tpu_custom_call.1} parent=67 // pred_fallthru
          _
      $region68: #{tpu_custom_call.1} parent=5 // pred_fallthru
        _
    $region6: #{tpu_custom_call.1} parent=1 // loop_footer
      %s20 = sadd.s32 1, %s16
    $region7: #{tpu_custom_call.1} parent=1 // loop_footer_branch
      %15 = sbr.rel target = $region3
    $region8: #{tpu_custom_call.1} parent=1 // loop_exit
      _
    %1975 = vsyncpa [#allocation3], 1
    %s1976 = scalar_lea.sflag [#allocation3], 1
    %1977 = vsyncpa %s1976, 1

</llo_original>
